<compile_context>
chip_gen: v6e
topology: v6e:2x2x1
jax: 0.10.0
libtpu: 0.0.40
codegen_flags: <defaults>
</compile_context>

<pallas_src>
import functools

import jax
import jax.numpy as jnp
from jax.experimental import pallas as pl
from jax.experimental.pallas import tpu as pltpu

LATENT_DIM = 48
LATENT_PAD = 128          # zero-padded K of the first matmul (MXU / lane aligned)
TARGET_DIM = 20
TARGET_PAD = 128          # lane-dense output slab; sliced back to 20 in the wrapper
HIDDEN = (600, 200, 100)
LN_EPS = 1e-5


def _linear(h, w_ref, b_ref):
    # bf16 MXU inputs, f32 accumulation, f32 bias add.
    return (
        jnp.dot(h.astype(jnp.bfloat16), w_ref[...],
                preferred_element_type=jnp.float32)
        + b_ref[...]
    )


def _layernorm_relu(h, g_ref, be_ref):
    # One-pass variance and gamma folded into the rsqrt scale: one cross-lane
    # reduction pass per layer instead of two.
    mu = jnp.mean(h, axis=-1, keepdims=True)
    var = jnp.mean(h * h, axis=-1, keepdims=True) - mu * mu
    scale = jax.lax.rsqrt(var + LN_EPS) * g_ref[...]
    return jnp.maximum((h - mu) * scale + be_ref[...], 0.0)


def generator_kernel(
    x_ref,
    w1_ref, b1_ref, g1_ref, be1_ref,
    w2_ref, b2_ref, g2_ref, be2_ref,
    w3_ref, b3_ref, g3_ref, be3_ref,
    w4_ref, b4_ref,
    o_ref,
):
    h = _layernorm_relu(_linear(x_ref[...], w1_ref, b1_ref), g1_ref, be1_ref)
    h = _layernorm_relu(_linear(h, w2_ref, b2_ref), g2_ref, be2_ref)
    h = _layernorm_relu(_linear(h, w3_ref, b3_ref), g3_ref, be3_ref)
    h = _linear(h, w4_ref, b4_ref)
    o_ref[...] = jax.nn.sigmoid(h)   # exp + reciprocal stay on the EUP slot


def _round_up(n, m):
    return (n + m - 1) // m * m


@functools.partial(jax.jit, static_argnames=("block_m",))
def generator_forward(x, params, *, block_m=256):
    """x: [B, LATENT_DIM] f32. params: list from init_params (weights bf16)."""
    batch = x.shape[0]
    bm = min(block_m, _round_up(batch, 8))      # batch tile (multiple of 8 sublanes)
    b_pad = _round_up(batch, bm)

    (w1, b1, g1, be1,
     w2, b2, g2, be2,
     w3, b3, g3, be3,
     w4, b4) = params

    # Zero-pad: batch rows to the tile, latent 48 -> 128, output 20 -> 128.
    x_p = jnp.pad(x.astype(jnp.float32),
                  ((0, b_pad - batch), (0, LATENT_PAD - LATENT_DIM)))
    w1_p = jnp.pad(w1, ((0, LATENT_PAD - LATENT_DIM), (0, 0)))
    w4_p = jnp.pad(w4, ((0, 0), (0, TARGET_PAD - TARGET_DIM)))
    b4_p = jnp.pad(b4, ((0, 0), (0, TARGET_PAD - TARGET_DIM)))

    kern_params = (w1_p, b1, g1, be1,
                   w2, b2, g2, be2,
                   w3, b3, g3, be3,
                   w4_p, b4_p)

    def const_spec(p):
        # Full-array block, constant block index -> DMA'd once, VMEM-resident
        # across all grid steps.
        return pl.BlockSpec(p.shape, lambda i: (0, 0))

    out = pl.pallas_call(
        generator_kernel,
        out_shape=jax.ShapeDtypeStruct((b_pad, TARGET_PAD), jnp.float32),
        grid_spec=pltpu.PrefetchScalarGridSpec(
            num_scalar_prefetch=0,
            grid=(b_pad // bm,),
            in_specs=[pl.BlockSpec((bm, LATENT_PAD), lambda i: (i, 0))]
                     + [const_spec(p) for p in kern_params],
            out_specs=pl.BlockSpec((bm, TARGET_PAD), lambda i: (i, 0)),
        ),
        compiler_params=pltpu.CompilerParams(
            dimension_semantics=("parallel",)),
    )(x_p, *kern_params)

    return out[:batch, :TARGET_DIM]


def init_params(key):
    """PyTorch-style uniform(+-1/sqrt(fan_in)) init.

    Weights stored as [in_features, out_features] in bf16 (MXU inputs);
    biases and LayerNorm affine params stay f32.
    """
    dims = (LATENT_DIM,) + HIDDEN + (TARGET_DIM,)
    params = []
    keys = jax.random.split(key, 2 * (len(dims) - 1))
    for li in range(len(dims) - 1):
        fan_in, fan_out = dims[li], dims[li + 1]
        bound = 1.0 / (fan_in ** 0.5)
        w = jax.random.uniform(keys[2 * li], (fan_in, fan_out),
                               minval=-bound, maxval=bound,
                               dtype=jnp.float32).astype(jnp.bfloat16)
        b = jax.random.uniform(keys[2 * li + 1], (1, fan_out),
                               minval=-bound, maxval=bound, dtype=jnp.float32)
        params.append(w)
        params.append(b)
        if li < len(dims) - 2:
            # LayerNorm affine params: gamma = 1, beta = 0 (PyTorch default).
            params.append(jnp.ones((1, fan_out), jnp.float32))
            params.append(jnp.zeros((1, fan_out), jnp.float32))
    return params


def reference_forward(x, params):
    """Pure-JAX reference (same bf16 matmul inputs, f32 everywhere else)."""
    (w1, b1, g1, be1,
     w2, b2, g2, be2,
     w3, b3, g3, be3,
     w4, b4) = params

    def lin(h, w, b):
        return jnp.dot(h.astype(jnp.bfloat16), w,
                       preferred_element_type=jnp.float32) + b

    def ln(h, g, bta):
        mu = jnp.mean(h, axis=-1, keepdims=True)
        var = jnp.mean((h - mu) ** 2, axis=-1, keepdims=True)
        return (h - mu) / jnp.sqrt(var + LN_EPS) * g + bta

    h = jnp.maximum(ln(lin(x, w1, b1), g1, be1), 0.0)
    h = jnp.maximum(ln(lin(h, w2, b2), g2, be2), 0.0)
    h = jnp.maximum(ln(lin(h, w3, b3), g3, be3), 0.0)
    return jax.nn.sigmoid(lin(h, w4, b4))


if __name__ == "__main__":
    key = jax.random.PRNGKey(0)
    k_param, k_x = jax.random.split(key)

    params = init_params(k_param)
    batch = 8
    x = jax.random.normal(k_x, (batch, LATENT_DIM), dtype=jnp.float32)

    out = generator_forward(x, params)
    out = jax.block_until_ready(out)

    ref = reference_forward(x, params)
    assert out.shape == (batch, TARGET_DIM)
    # bf16 matmul inputs + one-pass LN variance vs two-pass reference -> small
    # numerical slack (outputs are in [0, 1] after sigmoid).
    assert jnp.allclose(out, ref, atol=2e-3, rtol=2e-3), "mismatch vs reference"

    print("KERNEL_OK")
</pallas_src>

<mosaic_0001>
module attributes {stable_mosaic.version = 11 : i64} {
  func.func @generator_kernel(%arg0: i32, %arg1: memref<8x128xf32, #tpu.memory_space<vmem>>, %arg2: memref<128x600xbf16, #tpu.memory_space<vmem>>, %arg3: memref<1x600xf32, #tpu.memory_space<vmem>>, %arg4: memref<1x600xf32, #tpu.memory_space<vmem>>, %arg5: memref<1x600xf32, #tpu.memory_space<vmem>>, %arg6: memref<600x200xbf16, #tpu.memory_space<vmem>>, %arg7: memref<1x200xf32, #tpu.memory_space<vmem>>, %arg8: memref<1x200xf32, #tpu.memory_space<vmem>>, %arg9: memref<1x200xf32, #tpu.memory_space<vmem>>, %arg10: memref<200x100xbf16, #tpu.memory_space<vmem>>, %arg11: memref<1x100xf32, #tpu.memory_space<vmem>>, %arg12: memref<1x100xf32, #tpu.memory_space<vmem>>, %arg13: memref<1x100xf32, #tpu.memory_space<vmem>>, %arg14: memref<100x128xbf16, #tpu.memory_space<vmem>>, %arg15: memref<1x128xf32, #tpu.memory_space<vmem>>, %arg16: memref<8x128xf32, #tpu.memory_space<vmem>>) attributes {dimension_semantics = [#tpu.dimension_semantics<parallel>], iteration_bounds = array<i64: 1>, scalar_prefetch = 0 : i64, scratch_operands = 0 : i64, tpu.core_type = #tpu.core_type<tc>, window_params = [{transform_indices = @transform_0, window_bounds = array<i64: 8, 128>}, {pipeline_mode = #tpu.pipeline_mode<synchronous>, transform_indices = @transform_1, window_bounds = array<i64: 128, 600>}, {pipeline_mode = #tpu.pipeline_mode<synchronous>, transform_indices = @transform_2, window_bounds = array<i64: 1, 600>}, {pipeline_mode = #tpu.pipeline_mode<synchronous>, transform_indices = @transform_3, window_bounds = array<i64: 1, 600>}, {pipeline_mode = #tpu.pipeline_mode<synchronous>, transform_indices = @transform_4, window_bounds = array<i64: 1, 600>}, {pipeline_mode = #tpu.pipeline_mode<synchronous>, transform_indices = @transform_5, window_bounds = array<i64: 600, 200>}, {pipeline_mode = #tpu.pipeline_mode<synchronous>, transform_indices = @transform_6, window_bounds = array<i64: 1, 200>}, {pipeline_mode = #tpu.pipeline_mode<synchronous>, transform_indices = @transform_7, window_bounds = array<i64: 1, 200>}, {pipeline_mode = #tpu.pipeline_mode<synchronous>, transform_indices = @transform_8, window_bounds = array<i64: 1, 200>}, {pipeline_mode = #tpu.pipeline_mode<synchronous>, transform_indices = @transform_9, window_bounds = array<i64: 200, 100>}, {pipeline_mode = #tpu.pipeline_mode<synchronous>, transform_indices = @transform_10, window_bounds = array<i64: 1, 100>}, {pipeline_mode = #tpu.pipeline_mode<synchronous>, transform_indices = @transform_11, window_bounds = array<i64: 1, 100>}, {pipeline_mode = #tpu.pipeline_mode<synchronous>, transform_indices = @transform_12, window_bounds = array<i64: 1, 100>}, {pipeline_mode = #tpu.pipeline_mode<synchronous>, transform_indices = @transform_13, window_bounds = array<i64: 100, 128>}, {pipeline_mode = #tpu.pipeline_mode<synchronous>, transform_indices = @transform_14, window_bounds = array<i64: 1, 128>}, {transform_indices = @transform_15, window_bounds = array<i64: 8, 128>}]} {
    %c0 = arith.constant 0 : index
    %c0_0 = arith.constant 0 : index
    %0 = vector.load %arg1[%c0, %c0_0] : memref<8x128xf32, #tpu.memory_space<vmem>>, vector<8x128xf32>
    %1 = arith.truncf %0 : vector<8x128xf32> to vector<8x128xbf16>
    %c0_1 = arith.constant 0 : index
    %c0_2 = arith.constant 0 : index
    %2 = vector.load %arg2[%c0_1, %c0_2] : memref<128x600xbf16, #tpu.memory_space<vmem>>, vector<128x600xbf16>
    %cst = arith.constant dense<0.000000e+00> : vector<8x600xf32>
    %3 = tpu.matmul %1, %2, %cst {dimension_numbers = #tpu.dot_dimension_numbers<[1], [0], [0], [1], [0, 0, 1, 1], [], []>} : vector<8x128xbf16>, vector<128x600xbf16>, vector<8x600xf32> -> vector<8x600xf32>
    %c0_3 = arith.constant 0 : index
    %c0_4 = arith.constant 0 : index
    %4 = vector.load %arg3[%c0_3, %c0_4] : memref<1x600xf32, #tpu.memory_space<vmem>>, vector<1x600xf32>
    %5 = vector.broadcast %4 : vector<1x600xf32> to vector<8x600xf32>
    %6 = arith.addf %3, %5 : vector<8x600xf32>
    %cst_5 = arith.constant dense<0.000000e+00> : vector<8xf32>
    %7 = vector.multi_reduction <add>, %6, %cst_5 [1] : vector<8x600xf32> to vector<8xf32>
    %8 = vector.shape_cast %7 : vector<8xf32> to vector<8x1xf32>
    %cst_6 = arith.constant 6.000000e+02 : f32
    %9 = vector.broadcast %cst_6 : f32 to vector<8x1xf32>
    %10 = arith.divf %8, %9 : vector<8x1xf32>
    %11 = arith.mulf %6, %6 : vector<8x600xf32>
    %cst_7 = arith.constant dense<0.000000e+00> : vector<8xf32>
    %12 = vector.multi_reduction <add>, %11, %cst_7 [1] : vector<8x600xf32> to vector<8xf32>
    %13 = vector.shape_cast %12 : vector<8xf32> to vector<8x1xf32>
    %cst_8 = arith.constant 6.000000e+02 : f32
    %14 = vector.broadcast %cst_8 : f32 to vector<8x1xf32>
    %15 = arith.divf %13, %14 : vector<8x1xf32>
    %16 = arith.mulf %10, %10 : vector<8x1xf32>
    %17 = arith.subf %15, %16 : vector<8x1xf32>
    %cst_9 = arith.constant 9.99999974E-6 : f32
    %18 = vector.broadcast %cst_9 : f32 to vector<8x1xf32>
    %19 = arith.addf %17, %18 : vector<8x1xf32>
    %20 = math.rsqrt %19 : vector<8x1xf32>
    %c0_10 = arith.constant 0 : index
    %c0_11 = arith.constant 0 : index
    %21 = vector.load %arg4[%c0_10, %c0_11] : memref<1x600xf32, #tpu.memory_space<vmem>>, vector<1x600xf32>
    %22 = vector.broadcast %20 : vector<8x1xf32> to vector<8x600xf32>
    %23 = vector.broadcast %21 : vector<1x600xf32> to vector<8x600xf32>
    %24 = arith.mulf %22, %23 : vector<8x600xf32>
    %25 = vector.broadcast %10 : vector<8x1xf32> to vector<8x600xf32>
    %26 = arith.subf %6, %25 : vector<8x600xf32>
    %27 = arith.mulf %26, %24 : vector<8x600xf32>
    %c0_12 = arith.constant 0 : index
    %c0_13 = arith.constant 0 : index
    %28 = vector.load %arg5[%c0_12, %c0_13] : memref<1x600xf32, #tpu.memory_space<vmem>>, vector<1x600xf32>
    %29 = vector.broadcast %28 : vector<1x600xf32> to vector<8x600xf32>
    %30 = arith.addf %27, %29 : vector<8x600xf32>
    %cst_14 = arith.constant 0.000000e+00 : f32
    %31 = vector.broadcast %cst_14 : f32 to vector<8x600xf32>
    %32 = arith.maximumf %30, %31 : vector<8x600xf32>
    %33 = arith.truncf %32 : vector<8x600xf32> to vector<8x600xbf16>
    %c0_15 = arith.constant 0 : index
    %c0_16 = arith.constant 0 : index
    %34 = vector.load %arg6[%c0_15, %c0_16] : memref<600x200xbf16, #tpu.memory_space<vmem>>, vector<600x200xbf16>
    %cst_17 = arith.constant dense<0.000000e+00> : vector<8x200xf32>
    %35 = tpu.matmul %33, %34, %cst_17 {dimension_numbers = #tpu.dot_dimension_numbers<[1], [0], [0], [1], [0, 0, 1, 1], [], []>} : vector<8x600xbf16>, vector<600x200xbf16>, vector<8x200xf32> -> vector<8x200xf32>
    %c0_18 = arith.constant 0 : index
    %c0_19 = arith.constant 0 : index
    %36 = vector.load %arg7[%c0_18, %c0_19] : memref<1x200xf32, #tpu.memory_space<vmem>>, vector<1x200xf32>
    %37 = vector.broadcast %36 : vector<1x200xf32> to vector<8x200xf32>
    %38 = arith.addf %35, %37 : vector<8x200xf32>
    %cst_20 = arith.constant dense<0.000000e+00> : vector<8xf32>
    %39 = vector.multi_reduction <add>, %38, %cst_20 [1] : vector<8x200xf32> to vector<8xf32>
    %40 = vector.shape_cast %39 : vector<8xf32> to vector<8x1xf32>
    %cst_21 = arith.constant 2.000000e+02 : f32
    %41 = vector.broadcast %cst_21 : f32 to vector<8x1xf32>
    %42 = arith.divf %40, %41 : vector<8x1xf32>
    %43 = arith.mulf %38, %38 : vector<8x200xf32>
    %cst_22 = arith.constant dense<0.000000e+00> : vector<8xf32>
    %44 = vector.multi_reduction <add>, %43, %cst_22 [1] : vector<8x200xf32> to vector<8xf32>
    %45 = vector.shape_cast %44 : vector<8xf32> to vector<8x1xf32>
    %cst_23 = arith.constant 2.000000e+02 : f32
    %46 = vector.broadcast %cst_23 : f32 to vector<8x1xf32>
    %47 = arith.divf %45, %46 : vector<8x1xf32>
    %48 = arith.mulf %42, %42 : vector<8x1xf32>
    %49 = arith.subf %47, %48 : vector<8x1xf32>
    %cst_24 = arith.constant 9.99999974E-6 : f32
    %50 = vector.broadcast %cst_24 : f32 to vector<8x1xf32>
    %51 = arith.addf %49, %50 : vector<8x1xf32>
    %52 = math.rsqrt %51 : vector<8x1xf32>
    %c0_25 = arith.constant 0 : index
    %c0_26 = arith.constant 0 : index
    %53 = vector.load %arg8[%c0_25, %c0_26] : memref<1x200xf32, #tpu.memory_space<vmem>>, vector<1x200xf32>
    %54 = vector.broadcast %52 : vector<8x1xf32> to vector<8x200xf32>
    %55 = vector.broadcast %53 : vector<1x200xf32> to vector<8x200xf32>
    %56 = arith.mulf %54, %55 : vector<8x200xf32>
    %57 = vector.broadcast %42 : vector<8x1xf32> to vector<8x200xf32>
    %58 = arith.subf %38, %57 : vector<8x200xf32>
    %59 = arith.mulf %58, %56 : vector<8x200xf32>
    %c0_27 = arith.constant 0 : index
    %c0_28 = arith.constant 0 : index
    %60 = vector.load %arg9[%c0_27, %c0_28] : memref<1x200xf32, #tpu.memory_space<vmem>>, vector<1x200xf32>
    %61 = vector.broadcast %60 : vector<1x200xf32> to vector<8x200xf32>
    %62 = arith.addf %59, %61 : vector<8x200xf32>
    %cst_29 = arith.constant 0.000000e+00 : f32
    %63 = vector.broadcast %cst_29 : f32 to vector<8x200xf32>
    %64 = arith.maximumf %62, %63 : vector<8x200xf32>
    %65 = arith.truncf %64 : vector<8x200xf32> to vector<8x200xbf16>
    %c0_30 = arith.constant 0 : index
    %c0_31 = arith.constant 0 : index
    %66 = vector.load %arg10[%c0_30, %c0_31] : memref<200x100xbf16, #tpu.memory_space<vmem>>, vector<200x100xbf16>
    %cst_32 = arith.constant dense<0.000000e+00> : vector<8x100xf32>
    %67 = tpu.matmul %65, %66, %cst_32 {dimension_numbers = #tpu.dot_dimension_numbers<[1], [0], [0], [1], [0, 0, 1, 1], [], []>} : vector<8x200xbf16>, vector<200x100xbf16>, vector<8x100xf32> -> vector<8x100xf32>
    %c0_33 = arith.constant 0 : index
    %c0_34 = arith.constant 0 : index
    %68 = vector.load %arg11[%c0_33, %c0_34] : memref<1x100xf32, #tpu.memory_space<vmem>>, vector<1x100xf32>
    %69 = vector.broadcast %68 : vector<1x100xf32> to vector<8x100xf32>
    %70 = arith.addf %67, %69 : vector<8x100xf32>
    %cst_35 = arith.constant dense<0.000000e+00> : vector<8xf32>
    %71 = vector.multi_reduction <add>, %70, %cst_35 [1] : vector<8x100xf32> to vector<8xf32>
    %72 = vector.shape_cast %71 : vector<8xf32> to vector<8x1xf32>
    %cst_36 = arith.constant 1.000000e+02 : f32
    %73 = vector.broadcast %cst_36 : f32 to vector<8x1xf32>
    %74 = arith.divf %72, %73 : vector<8x1xf32>
    %75 = arith.mulf %70, %70 : vector<8x100xf32>
    %cst_37 = arith.constant dense<0.000000e+00> : vector<8xf32>
    %76 = vector.multi_reduction <add>, %75, %cst_37 [1] : vector<8x100xf32> to vector<8xf32>
    %77 = vector.shape_cast %76 : vector<8xf32> to vector<8x1xf32>
    %cst_38 = arith.constant 1.000000e+02 : f32
    %78 = vector.broadcast %cst_38 : f32 to vector<8x1xf32>
    %79 = arith.divf %77, %78 : vector<8x1xf32>
    %80 = arith.mulf %74, %74 : vector<8x1xf32>
    %81 = arith.subf %79, %80 : vector<8x1xf32>
    %cst_39 = arith.constant 9.99999974E-6 : f32
    %82 = vector.broadcast %cst_39 : f32 to vector<8x1xf32>
    %83 = arith.addf %81, %82 : vector<8x1xf32>
    %84 = math.rsqrt %83 : vector<8x1xf32>
    %c0_40 = arith.constant 0 : index
    %c0_41 = arith.constant 0 : index
    %85 = vector.load %arg12[%c0_40, %c0_41] : memref<1x100xf32, #tpu.memory_space<vmem>>, vector<1x100xf32>
    %86 = vector.broadcast %84 : vector<8x1xf32> to vector<8x100xf32>
    %87 = vector.broadcast %85 : vector<1x100xf32> to vector<8x100xf32>
    %88 = arith.mulf %86, %87 : vector<8x100xf32>
    %89 = vector.broadcast %74 : vector<8x1xf32> to vector<8x100xf32>
    %90 = arith.subf %70, %89 : vector<8x100xf32>
    %91 = arith.mulf %90, %88 : vector<8x100xf32>
    %c0_42 = arith.constant 0 : index
    %c0_43 = arith.constant 0 : index
    %92 = vector.load %arg13[%c0_42, %c0_43] : memref<1x100xf32, #tpu.memory_space<vmem>>, vector<1x100xf32>
    %93 = vector.broadcast %92 : vector<1x100xf32> to vector<8x100xf32>
    %94 = arith.addf %91, %93 : vector<8x100xf32>
    %cst_44 = arith.constant 0.000000e+00 : f32
    %95 = vector.broadcast %cst_44 : f32 to vector<8x100xf32>
    %96 = arith.maximumf %94, %95 : vector<8x100xf32>
    %97 = arith.truncf %96 : vector<8x100xf32> to vector<8x100xbf16>
    %c0_45 = arith.constant 0 : index
    %c0_46 = arith.constant 0 : index
    %98 = vector.load %arg14[%c0_45, %c0_46] : memref<100x128xbf16, #tpu.memory_space<vmem>>, vector<100x128xbf16>
    %cst_47 = arith.constant dense<0.000000e+00> : vector<8x128xf32>
    %99 = tpu.matmul %97, %98, %cst_47 {dimension_numbers = #tpu.dot_dimension_numbers<[1], [0], [0], [1], [0, 0, 1, 1], [], []>} : vector<8x100xbf16>, vector<100x128xbf16>, vector<8x128xf32> -> vector<8x128xf32>
    %c0_48 = arith.constant 0 : index
    %c0_49 = arith.constant 0 : index
    %100 = vector.load %arg15[%c0_48, %c0_49] : memref<1x128xf32, #tpu.memory_space<vmem>>, vector<1x128xf32>
    %101 = vector.broadcast %100 : vector<1x128xf32> to vector<8x128xf32>
    %102 = arith.addf %99, %101 : vector<8x128xf32>
    %103 = arith.negf %102 : vector<8x128xf32>
    %104 = math.exp %103 : vector<8x128xf32>
    %cst_50 = arith.constant 1.000000e+00 : f32
    %105 = vector.broadcast %cst_50 : f32 to vector<8x128xf32>
    %106 = arith.addf %105, %104 : vector<8x128xf32>
    %107 = arith.divf %105, %106 : vector<8x128xf32>
    %c0_51 = arith.constant 0 : index
    %c0_52 = arith.constant 0 : index
    %108 = vector.load %arg16[%c0_51, %c0_52] : memref<8x128xf32, #tpu.memory_space<vmem>>, vector<8x128xf32>
    tpu.vector_store %arg16[%c0_51, %c0_52], %107 {strides = array<i32>} : memref<8x128xf32, #tpu.memory_space<vmem>>, vector<8x128xf32>,
    return
  }
  func.func @transform_0(%arg0: i32) -> (i32, i32) {
    %c0_i32 = arith.constant 0 : i32
    %c0_i32_0 = arith.constant 0 : i32
    return %arg0, %c0_i32 : i32, i32
  }
  func.func @transform_1(%arg0: i32) -> (i32, i32) {
    %c0_i32 = arith.constant 0 : i32
    %c0_i32_0 = arith.constant 0 : i32
    %c0_i32_1 = arith.constant 0 : i32
    return %c0_i32, %c0_i32_0 : i32, i32
  }
  func.func @transform_2(%arg0: i32) -> (i32, i32) {
    %c0_i32 = arith.constant 0 : i32
    %c0_i32_0 = arith.constant 0 : i32
    %c0_i32_1 = arith.constant 0 : i32
    return %c0_i32, %c0_i32_0 : i32, i32
  }
  func.func @transform_3(%arg0: i32) -> (i32, i32) {
    %c0_i32 = arith.constant 0 : i32
    %c0_i32_0 = arith.constant 0 : i32
    %c0_i32_1 = arith.constant 0 : i32
    return %c0_i32, %c0_i32_0 : i32, i32
  }
  func.func @transform_4(%arg0: i32) -> (i32, i32) {
    %c0_i32 = arith.constant 0 : i32
    %c0_i32_0 = arith.constant 0 : i32
    %c0_i32_1 = arith.constant 0 : i32
    return %c0_i32, %c0_i32_0 : i32, i32
  }
  func.func @transform_5(%arg0: i32) -> (i32, i32) {
    %c0_i32 = arith.constant 0 : i32
    %c0_i32_0 = arith.constant 0 : i32
    %c0_i32_1 = arith.constant 0 : i32
    return %c0_i32, %c0_i32_0 : i32, i32
  }
  func.func @transform_6(%arg0: i32) -> (i32, i32) {
    %c0_i32 = arith.constant 0 : i32
    %c0_i32_0 = arith.constant 0 : i32
    %c0_i32_1 = arith.constant 0 : i32
    return %c0_i32, %c0_i32_0 : i32, i32
  }
  func.func @transform_7(%arg0: i32) -> (i32, i32) {
    %c0_i32 = arith.constant 0 : i32
    %c0_i32_0 = arith.constant 0 : i32
    %c0_i32_1 = arith.constant 0 : i32
    return %c0_i32, %c0_i32_0 : i32, i32
  }
  func.func @transform_8(%arg0: i32) -> (i32, i32) {
    %c0_i32 = arith.constant 0 : i32
    %c0_i32_0 = arith.constant 0 : i32
    %c0_i32_1 = arith.constant 0 : i32
    return %c0_i32, %c0_i32_0 : i32, i32
  }
  func.func @transform_9(%arg0: i32) -> (i32, i32) {
    %c0_i32 = arith.constant 0 : i32
    %c0_i32_0 = arith.constant 0 : i32
    %c0_i32_1 = arith.constant 0 : i32
    return %c0_i32, %c0_i32_0 : i32, i32
  }
  func.func @transform_10(%arg0: i32) -> (i32, i32) {
    %c0_i32 = arith.constant 0 : i32
    %c0_i32_0 = arith.constant 0 : i32
    %c0_i32_1 = arith.constant 0 : i32
    return %c0_i32, %c0_i32_0 : i32, i32
  }
  func.func @transform_11(%arg0: i32) -> (i32, i32) {
    %c0_i32 = arith.constant 0 : i32
    %c0_i32_0 = arith.constant 0 : i32
    %c0_i32_1 = arith.constant 0 : i32
    return %c0_i32, %c0_i32_0 : i32, i32
  }
  func.func @transform_12(%arg0: i32) -> (i32, i32) {
    %c0_i32 = arith.constant 0 : i32
    %c0_i32_0 = arith.constant 0 : i32
    %c0_i32_1 = arith.constant 0 : i32
    return %c0_i32, %c0_i32_0 : i32, i32
  }
  func.func @transform_13(%arg0: i32) -> (i32, i32) {
    %c0_i32 = arith.constant 0 : i32
    %c0_i32_0 = arith.constant 0 : i32
    %c0_i32_1 = arith.constant 0 : i32
    return %c0_i32, %c0_i32_0 : i32, i32
  }
  func.func @transform_14(%arg0: i32) -> (i32, i32) {
    %c0_i32 = arith.constant 0 : i32
    %c0_i32_0 = arith.constant 0 : i32
    %c0_i32_1 = arith.constant 0 : i32
    return %c0_i32, %c0_i32_0 : i32, i32
  }
  func.func @transform_15(%arg0: i32) -> (i32, i32) {
    %c0_i32 = arith.constant 0 : i32
    %c0_i32_0 = arith.constant 0 : i32
    return %arg0, %c0_i32 : i32, i32
  }
}

</mosaic_0001>

<llo_original>
// kernel: generator_forward.1
$region0: #{generator_forward.1}
  #allocation0 [shape = 'u32[]', space=smem, size = 0x4, offset = 0x4, fixed_abs, tag = 'smem constant byte address 0x4 - core index']
  #allocation1 [shape = 'u32[144,128]{1,0:T(1,128)}', space=vmem, size = 0x12000, scoped, tag = 'internal scratch']
  %s0 = inlined_call_operand.vmem [shape: f32[8,128], index: 0, kind: input, shape index: {}]
  %s1 = inlined_call_operand.vmem [shape: bf16[128,600], index: 1, kind: input, shape index: {}]
  %s2 = inlined_call_operand.vmem [shape: f32[1,600], index: 2, kind: input, shape index: {}]
  %s3 = inlined_call_operand.vmem [shape: f32[1,600], index: 3, kind: input, shape index: {}]
  %s4 = inlined_call_operand.vmem [shape: f32[1,600], index: 4, kind: input, shape index: {}]
  %s5 = inlined_call_operand.vmem [shape: bf16[600,200], index: 5, kind: input, shape index: {}]
  %s6 = inlined_call_operand.vmem [shape: f32[1,200], index: 6, kind: input, shape index: {}]
  %s7 = inlined_call_operand.vmem [shape: f32[1,200], index: 7, kind: input, shape index: {}]
  %s8 = inlined_call_operand.vmem [shape: f32[1,200], index: 8, kind: input, shape index: {}]
  %s9 = inlined_call_operand.vmem [shape: bf16[200,100], index: 9, kind: input, shape index: {}]
  %s10 = inlined_call_operand.vmem [shape: f32[1,100], index: 10, kind: input, shape index: {}]
  %s11 = inlined_call_operand.vmem [shape: f32[1,100], index: 11, kind: input, shape index: {}]
  %s12 = inlined_call_operand.vmem [shape: f32[1,100], index: 12, kind: input, shape index: {}]
  %s13 = inlined_call_operand.vmem [shape: bf16[100,128], index: 13, kind: input, shape index: {}]
  %s14 = inlined_call_operand.vmem [shape: f32[1,128], index: 14, kind: input, shape index: {}]
  %s15 = inlined_call_operand.hbm [shape: f32[8,128], index: 15, kind: output, shape index: {}]
  %s16 = sld [smem:[#allocation0]]
  $region70: #{generator_forward.1} parent=0
    _
  %s18 = ssub.s32 1, %s16
  %s19 = scalar_select 0, %s18, %s16
  $region1: #{generator_forward.1} parent=0
    #allocation2 [shape = 'u8[4096]{0}', space=vmem, size = 0x1000, scoped, tag = 'output window, operand 0, single buffered']
    #allocation3 [shape = 's32[1]{0}', space=sflag, size = 0x4, scoped, tag = 'scoped memory for generator_forward.1']
    %20 = vsyncpa [#allocation3], 0
    // Predicated region
    $region2: #{generator_forward.1} parent=1 // pred_check
      _
    $region3: #{generator_forward.1} parent=1 // pred_check_branch
      %22 = sbr.rel (0) target = $region5
    $region4: #{generator_forward.1} parent=1 // pred_region
      _
    $region5: #{generator_forward.1} parent=1 // pred_fallthru
      _
    // Predicated region
    $region6: #{generator_forward.1} parent=1 // pred_check
      _
    $region7: #{generator_forward.1} parent=1 // pred_check_branch
      %24 = sbr.rel (0) target = $region9
    $region8: #{generator_forward.1} parent=1 // pred_region
      _
    $region9: #{generator_forward.1} parent=1 // pred_fallthru
      _
    // Predicated region
    $region10: #{generator_forward.1} parent=1 // pred_check
      _
    $region11: #{generator_forward.1} parent=1 // pred_check_branch
      %26 = sbr.rel (0) target = $region13
    $region12: #{generator_forward.1} parent=1 // pred_region
      _
    $region13: #{generator_forward.1} parent=1 // pred_fallthru
      _
    // Predicated region
    $region14: #{generator_forward.1} parent=1 // pred_check
      _
    $region15: #{generator_forward.1} parent=1 // pred_check_branch
      %28 = sbr.rel (0) target = $region17
    $region16: #{generator_forward.1} parent=1 // pred_region
      _
    $region17: #{generator_forward.1} parent=1 // pred_fallthru
      _
    // Predicated region
    $region18: #{generator_forward.1} parent=1 // pred_check
      _
    $region19: #{generator_forward.1} parent=1 // pred_check_branch
      %30 = sbr.rel (0) target = $region21
    $region20: #{generator_forward.1} parent=1 // pred_region
      _
    $region21: #{generator_forward.1} parent=1 // pred_fallthru
      _
    // Predicated region
    $region22: #{generator_forward.1} parent=1 // pred_check
      _
    $region23: #{generator_forward.1} parent=1 // pred_check_branch
      %32 = sbr.rel (0) target = $region25
    $region24: #{generator_forward.1} parent=1 // pred_region
      _
    $region25: #{generator_forward.1} parent=1 // pred_fallthru
      _
    // Predicated region
    $region26: #{generator_forward.1} parent=1 // pred_check
      _
    $region27: #{generator_forward.1} parent=1 // pred_check_branch
      %34 = sbr.rel (0) target = $region29
    $region28: #{generator_forward.1} parent=1 // pred_region
      _
    $region29: #{generator_forward.1} parent=1 // pred_fallthru
      _
    // Predicated region
    $region30: #{generator_forward.1} parent=1 // pred_check
      _
    $region31: #{generator_forward.1} parent=1 // pred_check_branch
      %36 = sbr.rel (0) target = $region33
    $region32: #{generator_forward.1} parent=1 // pred_region
      _
    $region33: #{generator_forward.1} parent=1 // pred_fallthru
      _
    // Predicated region
    $region34: #{generator_forward.1} parent=1 // pred_check
      _
    $region35: #{generator_forward.1} parent=1 // pred_check_branch
      %38 = sbr.rel (0) target = $region37
    $region36: #{generator_forward.1} parent=1 // pred_region
      _
    $region37: #{generator_forward.1} parent=1 // pred_fallthru
      _
    // Predicated region
    $region38: #{generator_forward.1} parent=1 // pred_check
      _
    $region39: #{generator_forward.1} parent=1 // pred_check_branch
      %40 = sbr.rel (0) target = $region41
    $region40: #{generator_forward.1} parent=1 // pred_region
      _
    $region41: #{generator_forward.1} parent=1 // pred_fallthru
      _
    // Predicated region
    $region42: #{generator_forward.1} parent=1 // pred_check
      _
    $region43: #{generator_forward.1} parent=1 // pred_check_branch
      %42 = sbr.rel (0) target = $region45
    $region44: #{generator_forward.1} parent=1 // pred_region
      _
    $region45: #{generator_forward.1} parent=1 // pred_fallthru
      _
    // Predicated region
    $region46: #{generator_forward.1} parent=1 // pred_check
      _
    $region47: #{generator_forward.1} parent=1 // pred_check_branch
      %44 = sbr.rel (0) target = $region49
    $region48: #{generator_forward.1} parent=1 // pred_region
      _
    $region49: #{generator_forward.1} parent=1 // pred_fallthru
      _
    // Predicated region
    $region50: #{generator_forward.1} parent=1 // pred_check
      _
    $region51: #{generator_forward.1} parent=1 // pred_check_branch
      %46 = sbr.rel (0) target = $region53
    $region52: #{generator_forward.1} parent=1 // pred_region
      _
    $region53: #{generator_forward.1} parent=1 // pred_fallthru
      _
    // Predicated region
    $region54: #{generator_forward.1} parent=1 // pred_check
      _
    $region55: #{generator_forward.1} parent=1 // pred_check_branch
      %48 = sbr.rel (0) target = $region57
    $region56: #{generator_forward.1} parent=1 // pred_region
      _
    $region57: #{generator_forward.1} parent=1 // pred_fallthru
      _
    // Predicated region
    $region58: #{generator_forward.1} parent=1 // pred_check
      _
    $region59: #{generator_forward.1} parent=1 // pred_check_branch
      %50 = sbr.rel (0) target = $region61
    $region60: #{generator_forward.1} parent=1 // pred_region
      _
    $region61: #{generator_forward.1} parent=1 // pred_fallthru
      _
    %v52 = vld [vmem:[%s0] sm:$0xff]
    %v53 = vpack.c.bf16 %v52, %v52
    %v54 = vld [vmem:[%s1] sm:$0xff]
    %v55 = vld [vmem:[%s1 + $0x8] sm:$0xff]
    %v56 = vld [vmem:[%s1 + $0x10] sm:$0xf]
    %v57 = vld [vmem:[%s1 + $0x14] sm:$0xff]
    %v58 = vld [vmem:[%s1 + $0x1c] sm:$0xff]
    %v59 = vld [vmem:[%s1 + $0x24] sm:$0xf]
    %v60 = vld [vmem:[%s1 + $0x28] sm:$0xff]
    %v61 = vld [vmem:[%s1 + $0x30] sm:$0xff]
    %v62 = vld [vmem:[%s1 + $0x38] sm:$0xf]
    %v63 = vld [vmem:[%s1 + $0x3c] sm:$0xff]
    %v64 = vld [vmem:[%s1 + $0x44] sm:$0xff]
    %v65 = vld [vmem:[%s1 + $0x4c] sm:$0xf]
    %v66 = vld [vmem:[%s1 + $0x50] sm:$0xff]
    %v67 = vld [vmem:[%s1 + $0x58] sm:$0xff]
    %v68 = vld [vmem:[%s1 + $0x60] sm:$0xf]
    %v69 = vld [vmem:[%s1 + $0x64] sm:$0xff]
    %v70 = vld [vmem:[%s1 + $0x6c] sm:$0xff]
    %v71 = vld [vmem:[%s1 + $0x74] sm:$0xf]
    %v72 = vld [vmem:[%s1 + $0x78] sm:$0xff]
    %v73 = vld [vmem:[%s1 + $0x80] sm:$0xff]
    %v74 = vld [vmem:[%s1 + $0x88] sm:$0xf]
    %v75 = vld [vmem:[%s1 + $0x8c] sm:$0xff]
    %v76 = vld [vmem:[%s1 + $0x94] sm:$0xff]
    %v77 = vld [vmem:[%s1 + $0x9c] sm:$0xf]
    %v78 = vld [vmem:[%s1 + $0xa0] sm:$0xff]
    %v79 = vld [vmem:[%s1 + $0xa8] sm:$0xff]
    %v80 = vld [vmem:[%s1 + $0xb0] sm:$0xf]
    %v81 = vld [vmem:[%s1 + $0xb4] sm:$0xff]
    %v82 = vld [vmem:[%s1 + $0xbc] sm:$0xff]
    %v83 = vld [vmem:[%s1 + $0xc4] sm:$0xf]
    %v84 = vld [vmem:[%s1 + $0xc8] sm:$0xff]
    %v85 = vld [vmem:[%s1 + $0xd0] sm:$0xff]
    %v86 = vld [vmem:[%s1 + $0xd8] sm:$0xf]
    %v87 = vld [vmem:[%s1 + $0xdc] sm:$0xff]
    %v88 = vld [vmem:[%s1 + $0xe4] sm:$0xff]
    %v89 = vld [vmem:[%s1 + $0xec] sm:$0xf]
    %v90 = vld [vmem:[%s1 + $0xf0] sm:$0xff]
    %v91 = vld [vmem:[%s1 + $0xf8] sm:$0xff]
    %v92 = vld [vmem:[%s1 + $0x100] sm:$0xf]
    %v93 = vld [vmem:[%s1 + $0x104] sm:$0xff]
    %v94 = vld [vmem:[%s1 + $0x10c] sm:$0xff]
    %v95 = vld [vmem:[%s1 + $0x114] sm:$0xf]
    %v96 = vld [vmem:[%s1 + $0x118] sm:$0xff]
    %v97 = vld [vmem:[%s1 + $0x120] sm:$0xff]
    %v98 = vld [vmem:[%s1 + $0x128] sm:$0xf]
    %v99 = vld [vmem:[%s1 + $0x12c] sm:$0xff]
    %v100 = vld [vmem:[%s1 + $0x134] sm:$0xff]
    %v101 = vld [vmem:[%s1 + $0x13c] sm:$0xf]
    %v102 = vld [vmem:[%s2] sm:$0x1f]
    %v104 = vlaneseq
    %v105 = vshrl.u32 %v104, 7
    %v106 = vsub.s32 0, %v105
    %v107 = vrot.slane %v102, %v106
    %v108 = vlaneseq
    %v109 = vshrl.u32 %v108, 7
    %v110 = vsub.s32 1, %v109
    %v111 = vrot.slane %v102, %v110
    %v112 = vlaneseq
    %v113 = vshrl.u32 %v112, 7
    %v114 = vsub.s32 2, %v113
    %v115 = vrot.slane %v102, %v114
    %v116 = vlaneseq
    %v117 = vshrl.u32 %v116, 7
    %v118 = vsub.s32 3, %v117
    %v119 = vrot.slane %v102, %v118
    %v120 = vlaneseq
    %v121 = vshrl.u32 %v120, 7
    %v122 = vsub.s32 4, %v121
    %v123 = vrot.slane %v102, %v122
    %v177 = vunpack.c.l.b16 %v54
    %v178 = vunpack.c.h.b16 %v54
    %v179 = vunpack.c.l.b16 %v55
    %v180 = vunpack.c.h.b16 %v55
    %v181 = vunpack.c.l.b16 %v56
    %v182 = vunpack.c.l.b16 %v57
    %v183 = vunpack.c.h.b16 %v57
    %v184 = vunpack.c.l.b16 %v58
    %v185 = vunpack.c.h.b16 %v58
    %v186 = vunpack.c.l.b16 %v59
    %v187 = vunpack.c.l.b16 %v60
    %v188 = vunpack.c.h.b16 %v60
    %v189 = vunpack.c.l.b16 %v61
    %v190 = vunpack.c.h.b16 %v61
    %v191 = vunpack.c.l.b16 %v62
    %v192 = vunpack.c.l.b16 %v63
    %v193 = vunpack.c.h.b16 %v63
    %v194 = vunpack.c.l.b16 %v64
    %v195 = vunpack.c.h.b16 %v64
    %v196 = vunpack.c.l.b16 %v65
    %v197 = vunpack.c.l.b16 %v66
    %v198 = vunpack.c.h.b16 %v66
    %v199 = vunpack.c.l.b16 %v67
    %v200 = vunpack.c.h.b16 %v67
    %v201 = vunpack.c.l.b16 %v68
    %v202 = vunpack.c.l.b16 %v69
    %v203 = vunpack.c.h.b16 %v69
    %v204 = vunpack.c.l.b16 %v70
    %v205 = vunpack.c.h.b16 %v70
    %v206 = vunpack.c.l.b16 %v71
    %v207 = vunpack.c.l.b16 %v72
    %v208 = vunpack.c.h.b16 %v72
    %v209 = vunpack.c.l.b16 %v73
    %v210 = vunpack.c.h.b16 %v73
    %v211 = vunpack.c.l.b16 %v74
    %v212 = vunpack.c.l.b16 %v75
    %v213 = vunpack.c.h.b16 %v75
    %v214 = vunpack.c.l.b16 %v76
    %v215 = vunpack.c.h.b16 %v76
    %v216 = vunpack.c.l.b16 %v77
    %v217 = vunpack.c.l.b16 %v78
    %v218 = vunpack.c.h.b16 %v78
    %v219 = vunpack.c.l.b16 %v79
    %v220 = vunpack.c.h.b16 %v79
    %v221 = vunpack.c.l.b16 %v80
    %v222 = vunpack.c.l.b16 %v81
    %v223 = vunpack.c.h.b16 %v81
    %v224 = vunpack.c.l.b16 %v82
    %v225 = vunpack.c.h.b16 %v82
    %v226 = vunpack.c.l.b16 %v83
    %v227 = vunpack.c.l.b16 %v84
    %v228 = vunpack.c.h.b16 %v84
    %v229 = vunpack.c.l.b16 %v85
    %v230 = vunpack.c.h.b16 %v85
    %v231 = vunpack.c.l.b16 %v86
    %v232 = vunpack.c.l.b16 %v87
    %v233 = vunpack.c.h.b16 %v87
    %v234 = vunpack.c.l.b16 %v88
    %v235 = vunpack.c.h.b16 %v88
    %v236 = vunpack.c.l.b16 %v89
    %v237 = vunpack.c.l.b16 %v90
    %v238 = vunpack.c.h.b16 %v90
    %v239 = vunpack.c.l.b16 %v91
    %v240 = vunpack.c.h.b16 %v91
    %v241 = vunpack.c.l.b16 %v92
    %v242 = vunpack.c.l.b16 %v93
    %v243 = vunpack.c.h.b16 %v93
    %v244 = vunpack.c.l.b16 %v94
    %v245 = vunpack.c.h.b16 %v94
    %v246 = vunpack.c.l.b16 %v95
    %v247 = vunpack.c.l.b16 %v96
    %v248 = vunpack.c.h.b16 %v96
    %v249 = vunpack.c.l.b16 %v97
    %v250 = vunpack.c.h.b16 %v97
    %v251 = vunpack.c.l.b16 %v98
    %v252 = vunpack.c.l.b16 %v99
    %v253 = vunpack.c.h.b16 %v99
    %v254 = vunpack.c.l.b16 %v100
    %v255 = vunpack.c.h.b16 %v100
    %v256 = vunpack.c.l.b16 %v101
    %v257 = vpack.c.b16 %v182, %v177
    %v258 = vpack.c.b16 %v183, %v178
    %v259 = vpack.c.b16 %v184, %v179
    %v260 = vpack.c.b16 %v185, %v180
    %v261 = vpack.c.b16 %v186, %v181
    %v262 = vpack.c.b16 %v192, %v187
    %v263 = vpack.c.b16 %v193, %v188
    %v264 = vpack.c.b16 %v194, %v189
    %v265 = vpack.c.b16 %v195, %v190
    %v266 = vpack.c.b16 %v196, %v191
    %v267 = vpack.c.b16 %v202, %v197
    %v268 = vpack.c.b16 %v203, %v198
    %v269 = vpack.c.b16 %v204, %v199
    %v270 = vpack.c.b16 %v205, %v200
    %v271 = vpack.c.b16 %v206, %v201
    %v272 = vpack.c.b16 %v212, %v207
    %v273 = vpack.c.b16 %v213, %v208
    %v274 = vpack.c.b16 %v214, %v209
    %v275 = vpack.c.b16 %v215, %v210
    %v276 = vpack.c.b16 %v216, %v211
    %v277 = vpack.c.b16 %v222, %v217
    %v278 = vpack.c.b16 %v223, %v218
    %v279 = vpack.c.b16 %v224, %v219
    %v280 = vpack.c.b16 %v225, %v220
    %v281 = vpack.c.b16 %v226, %v221
    %v282 = vpack.c.b16 %v232, %v227
    %v283 = vpack.c.b16 %v233, %v228
    %v284 = vpack.c.b16 %v234, %v229
    %v285 = vpack.c.b16 %v235, %v230
    %v286 = vpack.c.b16 %v236, %v231
    %v287 = vpack.c.b16 %v242, %v237
    %v288 = vpack.c.b16 %v243, %v238
    %v289 = vpack.c.b16 %v244, %v239
    %v290 = vpack.c.b16 %v245, %v240
    %v291 = vpack.c.b16 %v246, %v241
    %v292 = vpack.c.b16 %v252, %v247
    %v293 = vpack.c.b16 %v253, %v248
    %v294 = vpack.c.b16 %v254, %v249
    %v295 = vpack.c.b16 %v255, %v250
    %v296 = vpack.c.b16 %v256, %v251
    %337 = vmatprep.subr.bf16.mxu0 %v293
    %338 = vmatpush1.bf16.msra.mxu0 %v292
    %339 = vmatprep.subr.bf16.mxu0 %v288
    %340 = vmatpush1.bf16.msra.mxu0 %v287
    %341 = vmatprep.subr.bf16.mxu0 %v283
    %342 = vmatpush1.bf16.msra.mxu0 %v282
    %343 = vmatprep.subr.bf16.mxu0 %v278
    %344 = vmatpush1.bf16.msra.mxu0 %v277
    %345 = vmatprep.subr.bf16.mxu0 %v273
    %346 = vmatpush1.bf16.msra.mxu0 %v272
    %347 = vmatprep.subr.bf16.mxu0 %v268
    %348 = vmatpush1.bf16.msra.mxu0 %v267
    %349 = vmatprep.subr.bf16.mxu0 %v263
    %350 = vmatpush1.bf16.msra.mxu0 %v262
    %351 = vmatprep.subr.bf16.mxu0 %v258
    %352 = vmatpush1.bf16.msra.mxu0 %v257
    %353 = vmatprep.subr.bf16.mxu0 0
    %354 = vmatpush2.bf16.msra.mxu0 0
    %355 = vmatprep.subr.bf16.mxu0 0
    %356 = vmatpush2.bf16.msra.mxu0 0
    %357 = vmatprep.subr.bf16.mxu0 0
    %358 = vmatpush2.bf16.msra.mxu0 0
    %359 = vmatprep.subr.bf16.mxu0 0
    %360 = vmatpush2.bf16.msra.mxu0 0
    %361 = vmatprep.subr.bf16.mxu0 0
    %362 = vmatpush2.bf16.msra.mxu0 0
    %363 = vmatprep.subr.bf16.mxu0 0
    %364 = vmatpush2.bf16.msra.mxu0 0
    %365 = vmatprep.subr.bf16.mxu0 0
    %366 = vmatpush2.bf16.msra.mxu0 0
    %367 = vmatprep.subr.bf16.mxu0 0
    %368 = vmatpush2.bf16.msra.mxu0 0
    %369 = vmatprep.mubr.bf16.mxu0 0
    %370 = vmatmul.mubr.bf16.gmra.mxu0 %v53
    %v371 = vpop.f32.mrf.mxu0
    %v372 = vadd.f32 %v107, %v371
    %v373 = vpop.f32.mrf.mxu0
    %v374 = vadd.f32 %v111, %v373
    %v375 = vpop.f32.mrf.mxu0
    %v376 = vpop.f32.mrf.mxu0
    %377 = vdwg.mxu0
    %378 = vmatprep.subr.bf16.mxu0 %v295
    %379 = vmatpush1.bf16.msra.mxu0 %v294
    %380 = vmatprep.subr.bf16.mxu0 %v290
    %381 = vmatpush1.bf16.msra.mxu0 %v289
    %382 = vmatprep.subr.bf16.mxu0 %v285
    %383 = vmatpush1.bf16.msra.mxu0 %v284
    %384 = vmatprep.subr.bf16.mxu0 %v280
    %385 = vmatpush1.bf16.msra.mxu0 %v279
    %386 = vmatprep.subr.bf16.mxu0 %v275
    %387 = vmatpush1.bf16.msra.mxu0 %v274
    %388 = vmatprep.subr.bf16.mxu0 %v270
    %389 = vmatpush1.bf16.msra.mxu0 %v269
    %390 = vmatprep.subr.bf16.mxu0 %v265
    %391 = vmatpush1.bf16.msra.mxu0 %v264
    %392 = vmatprep.subr.bf16.mxu0 %v260
    %393 = vmatpush1.bf16.msra.mxu0 %v259
    %394 = vmatprep.subr.bf16.mxu0 0
    %395 = vmatpush2.bf16.msra.mxu0 0
    %396 = vmatprep.subr.bf16.mxu0 0
    %397 = vmatpush2.bf16.msra.mxu0 0
    %398 = vmatprep.subr.bf16.mxu0 0
    %399 = vmatpush2.bf16.msra.mxu0 0
    %400 = vmatprep.subr.bf16.mxu0 0
    %401 = vmatpush2.bf16.msra.mxu0 0
    %402 = vmatprep.subr.bf16.mxu0 0
    %403 = vmatpush2.bf16.msra.mxu0 0
    %404 = vmatprep.subr.bf16.mxu0 0
    %405 = vmatpush2.bf16.msra.mxu0 0
    %406 = vmatprep.subr.bf16.mxu0 0
    %407 = vmatpush2.bf16.msra.mxu0 0
    %408 = vmatprep.subr.bf16.mxu0 0
    %409 = vmatpush2.bf16.msra.mxu0 0
    %410 = vmatprep.mubr.bf16.mxu0 0
    %411 = vmatmul.mubr.bf16.gmra.mxu0 %v53
    %v412 = vpop.f32.mrf.mxu0
    %v413 = vadd.f32 %v115, %v412
    %v414 = vpop.f32.mrf.mxu0
    %v415 = vadd.f32 %v119, %v414
    %v416 = vpop.f32.mrf.mxu0
    %v417 = vpop.f32.mrf.mxu0
    %418 = vdwg.mxu0
    %419 = vmatprep.subr.bf16.mxu0 0
    %420 = vmatpush1.bf16.msra.mxu0 %v296
    %421 = vmatprep.subr.bf16.mxu0 0
    %422 = vmatpush1.bf16.msra.mxu0 %v291
    %423 = vmatprep.subr.bf16.mxu0 0
    %424 = vmatpush1.bf16.msra.mxu0 %v286
    %425 = vmatprep.subr.bf16.mxu0 0
    %426 = vmatpush1.bf16.msra.mxu0 %v281
    %427 = vmatprep.subr.bf16.mxu0 0
    %428 = vmatpush1.bf16.msra.mxu0 %v276
    %429 = vmatprep.subr.bf16.mxu0 0
    %430 = vmatpush1.bf16.msra.mxu0 %v271
    %431 = vmatprep.subr.bf16.mxu0 0
    %432 = vmatpush1.bf16.msra.mxu0 %v266
    %433 = vmatprep.subr.bf16.mxu0 0
    %434 = vmatpush1.bf16.msra.mxu0 %v261
    %435 = vmatprep.subr.bf16.mxu0 0
    %436 = vmatpush2.bf16.msra.mxu0 0
    %437 = vmatprep.subr.bf16.mxu0 0
    %438 = vmatpush2.bf16.msra.mxu0 0
    %439 = vmatprep.subr.bf16.mxu0 0
    %440 = vmatpush2.bf16.msra.mxu0 0
    %441 = vmatprep.subr.bf16.mxu0 0
    %442 = vmatpush2.bf16.msra.mxu0 0
    %443 = vmatprep.subr.bf16.mxu0 0
    %444 = vmatpush2.bf16.msra.mxu0 0
    %445 = vmatprep.subr.bf16.mxu0 0
    %446 = vmatpush2.bf16.msra.mxu0 0
    %447 = vmatprep.subr.bf16.mxu0 0
    %448 = vmatpush2.bf16.msra.mxu0 0
    %449 = vmatprep.subr.bf16.mxu0 0
    %450 = vmatpush2.bf16.msra.mxu0 0
    %451 = vmatprep.mubr.bf16.mxu0 0
    %452 = vmatmul.mubr.bf16.gmra.mxu0 %v53
    %v453 = vpop.f32.mrf.mxu0
    %v454 = vadd.f32 %v123, %v453
    %v455 = vpop.f32.mrf.mxu0
    %v456 = vpop.f32.mrf.mxu0
    %v457 = vpop.f32.mrf.mxu0
    %458 = vdwg.mxu0
    %v459 = vadd.f32 %v372, %v374
    %v460 = vadd.f32 %v459, %v413
    %v461 = vadd.f32 %v460, %v415
    %vm462 = vcmask 719872
    %v463 = vsel %vm462, %v454, 0.0
    %v464 = vadd.f32 %v461, %v463
    %465 = vadd.xlane.f32.xlu0 %v464
    %v466 = vpop.xlane.xlu0 %465
    %v467 = vrcp.pop 600.0
    %v468 = vmul.f32 %v466, %v467
    %v469 = vmul.f32 %v372, %v372
    %v470 = vmul.f32 %v374, %v374
    %v471 = vmul.f32 %v413, %v413
    %v472 = vmul.f32 %v415, %v415
    %v473 = vmul.f32 %v454, %v454
    %v474 = vadd.f32 %v469, %v470
    %v475 = vadd.f32 %v474, %v471
    %v476 = vadd.f32 %v475, %v472
    %v477 = vsel %vm462, %v473, 0.0
    %v478 = vadd.f32 %v476, %v477
    %479 = vadd.xlane.f32.xlu0 %v478
    %v480 = vpop.xlane.xlu0 %479
    %v481 = vmul.f32 %v480, %v467
    %v482 = vmul.f32 %v468, %v468
    %v483 = vsub.f32 %v481, %v482
    %v484 = vadd.f32 %v483, 1e-05
    %v485 = vrsqrt.pop %v484
    %v486 = vld [vmem:[%s3] sm:$0x1f]
    %v488 = vlaneseq
    %v489 = vshrl.u32 %v488, 7
    %v490 = vsub.s32 0, %v489
    %v491 = vrot.slane %v486, %v490
    %v492 = vlaneseq
    %v493 = vshrl.u32 %v492, 7
    %v494 = vsub.s32 1, %v493
    %v495 = vrot.slane %v486, %v494
    %v496 = vlaneseq
    %v497 = vshrl.u32 %v496, 7
    %v498 = vsub.s32 2, %v497
    %v499 = vrot.slane %v486, %v498
    %v500 = vlaneseq
    %v501 = vshrl.u32 %v500, 7
    %v502 = vsub.s32 3, %v501
    %v503 = vrot.slane %v486, %v502
    %v504 = vlaneseq
    %v505 = vshrl.u32 %v504, 7
    %v506 = vsub.s32 4, %v505
    %v507 = vrot.slane %v486, %v506
    %v513 = vmul.f32 %v485, %v491
    %v514 = vmul.f32 %v485, %v495
    %v515 = vmul.f32 %v485, %v499
    %v516 = vmul.f32 %v485, %v503
    %v517 = vmul.f32 %v485, %v507
    %v518 = vsub.f32 %v372, %v468
    %v519 = vsub.f32 %v374, %v468
    %v520 = vsub.f32 %v413, %v468
    %v521 = vsub.f32 %v415, %v468
    %v522 = vsub.f32 %v454, %v468
    %v523 = vmul.f32 %v518, %v513
    %v524 = vmul.f32 %v519, %v514
    %v525 = vmul.f32 %v520, %v515
    %v526 = vmul.f32 %v521, %v516
    %v527 = vmul.f32 %v522, %v517
    %v528 = vld [vmem:[%s4] sm:$0x1f]
    %v530 = vlaneseq
    %v531 = vshrl.u32 %v530, 7
    %v532 = vsub.s32 0, %v531
    %v533 = vrot.slane %v528, %v532
    %v534 = vlaneseq
    %v535 = vshrl.u32 %v534, 7
    %v536 = vsub.s32 1, %v535
    %v537 = vrot.slane %v528, %v536
    %v538 = vlaneseq
    %v539 = vshrl.u32 %v538, 7
    %v540 = vsub.s32 2, %v539
    %v541 = vrot.slane %v528, %v540
    %v542 = vlaneseq
    %v543 = vshrl.u32 %v542, 7
    %v544 = vsub.s32 3, %v543
    %v545 = vrot.slane %v528, %v544
    %v546 = vlaneseq
    %v547 = vshrl.u32 %v546, 7
    %v548 = vsub.s32 4, %v547
    %v549 = vrot.slane %v528, %v548
    %v555 = vadd.f32 %v523, %v533
    %v556 = vadd.f32 %v524, %v537
    %v557 = vadd.f32 %v525, %v541
    %v558 = vadd.f32 %v526, %v545
    %v559 = vadd.f32 %v527, %v549
    %v560 = vmax.f32 %v555, 0.0
    %v561 = vmax.f32 %v556, 0.0
    %v562 = vmax.f32 %v557, 0.0
    %v563 = vmax.f32 %v558, 0.0
    %v564 = vmax.f32 %v559, 0.0
    %v565 = vpack.c.bf16 %v560, %v560
    %v566 = vpack.c.bf16 %v561, %v561
    %v567 = vpack.c.bf16 %v562, %v562
    %v568 = vpack.c.bf16 %v563, %v563
    %v569 = vpack.c.bf16 %v564, %v564
    %v570 = vld [vmem:[%s5] sm:$0xff]
    %v571 = vld [vmem:[%s5 + $0x8] sm:$0xff]
    %v572 = vld [vmem:[%s5 + $0x10] sm:$0xff]
    %v573 = vld [vmem:[%s5 + $0x18] sm:$0xff]
    %v574 = vld [vmem:[%s5 + $0x20] sm:$0xff]
    %v575 = vld [vmem:[%s5 + $0x28] sm:$0xff]
    %v576 = vld [vmem:[%s5 + $0x30] sm:$0xff]
    %v577 = vld [vmem:[%s5 + $0x38] sm:$0xff]
    %v578 = vld [vmem:[%s5 + $0x40] sm:$0xff]
    %v579 = vld [vmem:[%s5 + $0x48] sm:$0xff]
    %v580 = vld [vmem:[%s5 + $0x50] sm:$0xff]
    %v581 = vld [vmem:[%s5 + $0x58] sm:$0xff]
    %v582 = vld [vmem:[%s5 + $0x60] sm:$0xff]
    %v583 = vld [vmem:[%s5 + $0x68] sm:$0xff]
    %v584 = vld [vmem:[%s5 + $0x70] sm:$0xff]
    %v585 = vld [vmem:[%s5 + $0x78] sm:$0xff]
    %v586 = vld [vmem:[%s5 + $0x80] sm:$0xff]
    %v587 = vld [vmem:[%s5 + $0x88] sm:$0xff]
    %v588 = vld [vmem:[%s5 + $0x90] sm:$0xff]
    %v589 = vld [vmem:[%s5 + $0x98] sm:$0xff]
    %v590 = vld [vmem:[%s5 + $0xa0] sm:$0xff]
    %v591 = vld [vmem:[%s5 + $0xa8] sm:$0xff]
    %v592 = vld [vmem:[%s5 + $0xb0] sm:$0xff]
    %v593 = vld [vmem:[%s5 + $0xb8] sm:$0xff]
    %v594 = vld [vmem:[%s5 + $0xc0] sm:$0xff]
    %v595 = vld [vmem:[%s5 + $0xc8] sm:$0xff]
    %v596 = vld [vmem:[%s5 + $0xd0] sm:$0xff]
    %v597 = vld [vmem:[%s5 + $0xd8] sm:$0xff]
    %v598 = vld [vmem:[%s5 + $0xe0] sm:$0xff]
    %v599 = vld [vmem:[%s5 + $0xe8] sm:$0xff]
    %v600 = vld [vmem:[%s5 + $0xf0] sm:$0xff]
    %v601 = vld [vmem:[%s5 + $0xf8] sm:$0xff]
    %v602 = vld [vmem:[%s5 + $0x100] sm:$0xff]
    %v603 = vld [vmem:[%s5 + $0x108] sm:$0xff]
    %v604 = vld [vmem:[%s5 + $0x110] sm:$0xff]
    %v605 = vld [vmem:[%s5 + $0x118] sm:$0xff]
    %v606 = vld [vmem:[%s5 + $0x120] sm:$0xff]
    %v607 = vld [vmem:[%s5 + $0x128] sm:$0xff]
    %v608 = vld [vmem:[%s5 + $0x130] sm:$0xff]
    %v609 = vld [vmem:[%s5 + $0x138] sm:$0xff]
    %v610 = vld [vmem:[%s5 + $0x140] sm:$0xff]
    %v611 = vld [vmem:[%s5 + $0x148] sm:$0xff]
    %v612 = vld [vmem:[%s5 + $0x150] sm:$0xff]
    %v613 = vld [vmem:[%s5 + $0x158] sm:$0xff]
    %v614 = vld [vmem:[%s5 + $0x160] sm:$0xff]
    %v615 = vld [vmem:[%s5 + $0x168] sm:$0xff]
    %v616 = vld [vmem:[%s5 + $0x170] sm:$0xff]
    %v617 = vld [vmem:[%s5 + $0x178] sm:$0xff]
    %v618 = vld [vmem:[%s5 + $0x180] sm:$0xff]
    %v619 = vld [vmem:[%s5 + $0x188] sm:$0xff]
    %v620 = vld [vmem:[%s5 + $0x190] sm:$0xff]
    %v621 = vld [vmem:[%s5 + $0x198] sm:$0xff]
    %v622 = vld [vmem:[%s5 + $0x1a0] sm:$0xff]
    %v623 = vld [vmem:[%s5 + $0x1a8] sm:$0xff]
    %v624 = vld [vmem:[%s5 + $0x1b0] sm:$0xff]
    %v625 = vld [vmem:[%s5 + $0x1b8] sm:$0xff]
    %v626 = vld [vmem:[%s5 + $0x1c0] sm:$0xff]
    %v627 = vld [vmem:[%s5 + $0x1c8] sm:$0xff]
    %v628 = vld [vmem:[%s5 + $0x1d0] sm:$0xff]
    %v629 = vld [vmem:[%s5 + $0x1d8] sm:$0xff]
    %v630 = vld [vmem:[%s5 + $0x1e0] sm:$0xff]
    %v631 = vld [vmem:[%s5 + $0x1e8] sm:$0xff]
    %v632 = vld [vmem:[%s5 + $0x1f0] sm:$0xff]
    %v633 = vld [vmem:[%s5 + $0x1f8] sm:$0xff]
    %v634 = vld [vmem:[%s5 + $0x200] sm:$0xff]
    %v635 = vld [vmem:[%s5 + $0x208] sm:$0xff]
    %v636 = vld [vmem:[%s5 + $0x210] sm:$0xff]
    %v637 = vld [vmem:[%s5 + $0x218] sm:$0xff]
    %v638 = vld [vmem:[%s5 + $0x220] sm:$0xff]
    %v639 = vld [vmem:[%s5 + $0x228] sm:$0xff]
    %v640 = vld [vmem:[%s5 + $0x230] sm:$0xff]
    %v641 = vld [vmem:[%s5 + $0x238] sm:$0xff]
    %v642 = vld [vmem:[%s5 + $0x240] sm:$0xff]
    %v643 = vld [vmem:[%s5 + $0x248] sm:$0xff]
    %v644 = vld [vmem:[%s5 + $0x250] sm:$0xff]
    %v645 = vld [vmem:[%s6] sm:$0x3]
    %v647 = vlaneseq
    %v648 = vshrl.u32 %v647, 7
    %v649 = vsub.s32 0, %v648
    %v650 = vrot.slane %v645, %v649
    %v651 = vlaneseq
    %v652 = vshrl.u32 %v651, 7
    %v653 = vsub.s32 1, %v652
    %v654 = vrot.slane %v645, %v653
    %v732 = vunpack.c.l.b16 %v570
    %v733 = vunpack.c.h.b16 %v570
    %v734 = vunpack.c.l.b16 %v571
    %v735 = vunpack.c.h.b16 %v571
    %v736 = vunpack.c.l.b16 %v572
    %v737 = vunpack.c.h.b16 %v572
    %v738 = vunpack.c.l.b16 %v573
    %v739 = vunpack.c.h.b16 %v573
    %v740 = vunpack.c.l.b16 %v574
    %v741 = vunpack.c.h.b16 %v574
    %v742 = vunpack.c.l.b16 %v575
    %v743 = vunpack.c.h.b16 %v575
    %v744 = vunpack.c.l.b16 %v576
    %v745 = vunpack.c.h.b16 %v576
    %v746 = vunpack.c.l.b16 %v577
    %v747 = vunpack.c.h.b16 %v577
    %v748 = vunpack.c.l.b16 %v578
    %v749 = vunpack.c.h.b16 %v578
    %v750 = vunpack.c.l.b16 %v579
    %v751 = vunpack.c.h.b16 %v579
    %v752 = vunpack.c.l.b16 %v580
    %v753 = vunpack.c.h.b16 %v580
    %v754 = vunpack.c.l.b16 %v581
    %v755 = vunpack.c.h.b16 %v581
    %v756 = vunpack.c.l.b16 %v582
    %v757 = vunpack.c.h.b16 %v582
    %v758 = vunpack.c.l.b16 %v583
    %v759 = vunpack.c.h.b16 %v583
    %v760 = vunpack.c.l.b16 %v584
    %v761 = vunpack.c.h.b16 %v584
    %v762 = vunpack.c.l.b16 %v585
    %v763 = vunpack.c.h.b16 %v585
    %v764 = vunpack.c.l.b16 %v586
    %v765 = vunpack.c.h.b16 %v586
    %v766 = vunpack.c.l.b16 %v587
    %v767 = vunpack.c.h.b16 %v587
    %v768 = vunpack.c.l.b16 %v588
    %v769 = vunpack.c.h.b16 %v588
    %v770 = vunpack.c.l.b16 %v589
    %v771 = vunpack.c.h.b16 %v589
    %v772 = vunpack.c.l.b16 %v590
    %v773 = vunpack.c.h.b16 %v590
    %v774 = vunpack.c.l.b16 %v591
    %v775 = vunpack.c.h.b16 %v591
    %v776 = vunpack.c.l.b16 %v592
    %v777 = vunpack.c.h.b16 %v592
    %v778 = vunpack.c.l.b16 %v593
    %v779 = vunpack.c.h.b16 %v593
    %v780 = vunpack.c.l.b16 %v594
    %v781 = vunpack.c.h.b16 %v594
    %v782 = vunpack.c.l.b16 %v595
    %v783 = vunpack.c.h.b16 %v595
    %v784 = vunpack.c.l.b16 %v596
    %v785 = vunpack.c.h.b16 %v596
    %v786 = vunpack.c.l.b16 %v597
    %v787 = vunpack.c.h.b16 %v597
    %v788 = vunpack.c.l.b16 %v598
    %v789 = vunpack.c.h.b16 %v598
    %v790 = vunpack.c.l.b16 %v599
    %v791 = vunpack.c.h.b16 %v599
    %v792 = vunpack.c.l.b16 %v600
    %v793 = vunpack.c.h.b16 %v600
    %v794 = vunpack.c.l.b16 %v601
    %v795 = vunpack.c.h.b16 %v601
    %v796 = vunpack.c.l.b16 %v602
    %v797 = vunpack.c.h.b16 %v602
    %v798 = vunpack.c.l.b16 %v603
    %v799 = vunpack.c.h.b16 %v603
    %v800 = vunpack.c.l.b16 %v604
    %v801 = vunpack.c.h.b16 %v604
    %v802 = vunpack.c.l.b16 %v605
    %v803 = vunpack.c.h.b16 %v605
    %v804 = vunpack.c.l.b16 %v606
    %v805 = vunpack.c.h.b16 %v606
    %v806 = vunpack.c.l.b16 %v607
    %v807 = vunpack.c.h.b16 %v607
    %v808 = vunpack.c.l.b16 %v608
    %v809 = vunpack.c.h.b16 %v608
    %v810 = vunpack.c.l.b16 %v609
    %v811 = vunpack.c.h.b16 %v609
    %v812 = vunpack.c.l.b16 %v610
    %v813 = vunpack.c.h.b16 %v610
    %v814 = vunpack.c.l.b16 %v611
    %v815 = vunpack.c.h.b16 %v611
    %v816 = vunpack.c.l.b16 %v612
    %v817 = vunpack.c.h.b16 %v612
    %v818 = vunpack.c.l.b16 %v613
    %v819 = vunpack.c.h.b16 %v613
    %v820 = vunpack.c.l.b16 %v614
    %v821 = vunpack.c.h.b16 %v614
    %v822 = vunpack.c.l.b16 %v615
    %v823 = vunpack.c.h.b16 %v615
    %v824 = vunpack.c.l.b16 %v616
    %v825 = vunpack.c.h.b16 %v616
    %v826 = vunpack.c.l.b16 %v617
    %v827 = vunpack.c.h.b16 %v617
    %v828 = vunpack.c.l.b16 %v618
    %v829 = vunpack.c.h.b16 %v618
    %v830 = vunpack.c.l.b16 %v619
    %v831 = vunpack.c.h.b16 %v619
    %v832 = vunpack.c.l.b16 %v620
    %v833 = vunpack.c.h.b16 %v620
    %v834 = vunpack.c.l.b16 %v621
    %v835 = vunpack.c.h.b16 %v621
    %v836 = vunpack.c.l.b16 %v622
    %v837 = vunpack.c.h.b16 %v622
    %v838 = vunpack.c.l.b16 %v623
    %v839 = vunpack.c.h.b16 %v623
    %v840 = vunpack.c.l.b16 %v624
    %v841 = vunpack.c.h.b16 %v624
    %v842 = vunpack.c.l.b16 %v625
    %v843 = vunpack.c.h.b16 %v625
    %v844 = vunpack.c.l.b16 %v626
    %v845 = vunpack.c.h.b16 %v626
    %v846 = vunpack.c.l.b16 %v627
    %v847 = vunpack.c.h.b16 %v627
    %v848 = vunpack.c.l.b16 %v628
    %v849 = vunpack.c.h.b16 %v628
    %v850 = vunpack.c.l.b16 %v629
    %v851 = vunpack.c.h.b16 %v629
    %v852 = vunpack.c.l.b16 %v630
    %v853 = vunpack.c.h.b16 %v630
    %v854 = vunpack.c.l.b16 %v631
    %v855 = vunpack.c.h.b16 %v631
    %v856 = vunpack.c.l.b16 %v632
    %v857 = vunpack.c.h.b16 %v632
    %v858 = vunpack.c.l.b16 %v633
    %v859 = vunpack.c.h.b16 %v633
    %v860 = vunpack.c.l.b16 %v634
    %v861 = vunpack.c.h.b16 %v634
    %v862 = vunpack.c.l.b16 %v635
    %v863 = vunpack.c.h.b16 %v635
    %v864 = vunpack.c.l.b16 %v636
    %v865 = vunpack.c.h.b16 %v636
    %v866 = vunpack.c.l.b16 %v637
    %v867 = vunpack.c.h.b16 %v637
    %v868 = vunpack.c.l.b16 %v638
    %v869 = vunpack.c.h.b16 %v638
    %v870 = vunpack.c.l.b16 %v639
    %v871 = vunpack.c.h.b16 %v639
    %v872 = vunpack.c.l.b16 %v640
    %v873 = vunpack.c.h.b16 %v640
    %v874 = vunpack.c.l.b16 %v641
    %v875 = vunpack.c.h.b16 %v641
    %v876 = vunpack.c.l.b16 %v642
    %v877 = vunpack.c.h.b16 %v642
    %v878 = vunpack.c.l.b16 %v643
    %v879 = vunpack.c.h.b16 %v643
    %v880 = vunpack.c.l.b16 %v644
    %v881 = vunpack.c.h.b16 %v644
    %v882 = vpack.c.b16 %v734, %v732
    %v883 = vpack.c.b16 %v735, %v733
    %v884 = vpack.c.b16 %v738, %v736
    %v885 = vpack.c.b16 %v739, %v737
    %v886 = vpack.c.b16 %v742, %v740
    %v887 = vpack.c.b16 %v743, %v741
    %v888 = vpack.c.b16 %v746, %v744
    %v889 = vpack.c.b16 %v747, %v745
    %v890 = vpack.c.b16 %v750, %v748
    %v891 = vpack.c.b16 %v751, %v749
    %v892 = vpack.c.b16 %v754, %v752
    %v893 = vpack.c.b16 %v755, %v753
    %v894 = vpack.c.b16 %v758, %v756
    %v895 = vpack.c.b16 %v759, %v757
    %v896 = vpack.c.b16 %v762, %v760
    %v897 = vpack.c.b16 %v763, %v761
    %v898 = vpack.c.b16 %v766, %v764
    %v899 = vpack.c.b16 %v767, %v765
    %v900 = vpack.c.b16 %v770, %v768
    %v901 = vpack.c.b16 %v771, %v769
    %v902 = vpack.c.b16 %v774, %v772
    %v903 = vpack.c.b16 %v775, %v773
    %v904 = vpack.c.b16 %v778, %v776
    %v905 = vpack.c.b16 %v779, %v777
    %v906 = vpack.c.b16 %v782, %v780
    %v907 = vpack.c.b16 %v783, %v781
    %v908 = vpack.c.b16 %v786, %v784
    %v909 = vpack.c.b16 %v787, %v785
    %v910 = vpack.c.b16 %v790, %v788
    %v911 = vpack.c.b16 %v791, %v789
    %v912 = vpack.c.b16 %v794, %v792
    %v913 = vpack.c.b16 %v795, %v793
    %v914 = vpack.c.b16 %v798, %v796
    %v915 = vpack.c.b16 %v799, %v797
    %v916 = vpack.c.b16 %v802, %v800
    %v917 = vpack.c.b16 %v803, %v801
    %v918 = vpack.c.b16 %v806, %v804
    %v919 = vpack.c.b16 %v807, %v805
    %v920 = vpack.c.b16 %v810, %v808
    %v921 = vpack.c.b16 %v811, %v809
    %v922 = vpack.c.b16 %v814, %v812
    %v923 = vpack.c.b16 %v815, %v813
    %v924 = vpack.c.b16 %v818, %v816
    %v925 = vpack.c.b16 %v819, %v817
    %v926 = vpack.c.b16 %v822, %v820
    %v927 = vpack.c.b16 %v823, %v821
    %v928 = vpack.c.b16 %v826, %v824
    %v929 = vpack.c.b16 %v827, %v825
    %v930 = vpack.c.b16 %v830, %v828
    %v931 = vpack.c.b16 %v831, %v829
    %v932 = vpack.c.b16 %v834, %v832
    %v933 = vpack.c.b16 %v835, %v833
    %v934 = vpack.c.b16 %v838, %v836
    %v935 = vpack.c.b16 %v839, %v837
    %v936 = vpack.c.b16 %v842, %v840
    %v937 = vpack.c.b16 %v843, %v841
    %v938 = vpack.c.b16 %v846, %v844
    %v939 = vpack.c.b16 %v847, %v845
    %v940 = vpack.c.b16 %v850, %v848
    %v941 = vpack.c.b16 %v851, %v849
    %v942 = vpack.c.b16 %v854, %v852
    %v943 = vpack.c.b16 %v855, %v853
    %v944 = vpack.c.b16 %v858, %v856
    %v945 = vpack.c.b16 %v859, %v857
    %v946 = vpack.c.b16 %v862, %v860
    %v947 = vpack.c.b16 %v863, %v861
    %v948 = vpack.c.b16 %v866, %v864
    %v949 = vpack.c.b16 %v867, %v865
    %v950 = vpack.c.b16 %v870, %v868
    %v951 = vpack.c.b16 %v871, %v869
    %v952 = vpack.c.b16 %v874, %v872
    %v953 = vpack.c.b16 %v875, %v873
    %v954 = vpack.c.b16 %v878, %v876
    %v955 = vpack.c.b16 %v879, %v877
    %v956 = vpack.c.b16 %v880, %v880
    %v957 = vpack.c.b16 %v881, %v881
    %v1033 = vsel %vm462, %v569, 0
    %vm1035 = vcmask 1043456
    %v1037 = vsel %vm1035, %v956, 0
    %v1040 = vsel %vm1035, %v957, 0
    %1042 = vmatprep.subr.bf16.mxu0 %v897
    %1043 = vmatpush1.bf16.msra.mxu0 %v896
    %1044 = vmatprep.subr.bf16.mxu0 %v895
    %1045 = vmatpush1.bf16.msra.mxu0 %v894
    %1046 = vmatprep.subr.bf16.mxu0 %v893
    %1047 = vmatpush1.bf16.msra.mxu0 %v892
    %1048 = vmatprep.subr.bf16.mxu0 %v891
    %1049 = vmatpush1.bf16.msra.mxu0 %v890
    %1050 = vmatprep.subr.bf16.mxu0 %v889
    %1051 = vmatpush1.bf16.msra.mxu0 %v888
    %1052 = vmatprep.subr.bf16.mxu0 %v887
    %1053 = vmatpush1.bf16.msra.mxu0 %v886
    %1054 = vmatprep.subr.bf16.mxu0 %v885
    %1055 = vmatpush1.bf16.msra.mxu0 %v884
    %1056 = vmatprep.subr.bf16.mxu0 %v883
    %1057 = vmatpush1.bf16.msra.mxu0 %v882
    %1058 = vmatprep.subr.bf16.mxu0 %v913
    %1059 = vmatpush2.bf16.msra.mxu0 %v912
    %1060 = vmatprep.subr.bf16.mxu0 %v911
    %1061 = vmatpush2.bf16.msra.mxu0 %v910
    %1062 = vmatprep.subr.bf16.mxu0 %v909
    %1063 = vmatpush2.bf16.msra.mxu0 %v908
    %1064 = vmatprep.subr.bf16.mxu0 %v907
    %1065 = vmatpush2.bf16.msra.mxu0 %v906
    %1066 = vmatprep.subr.bf16.mxu0 %v905
    %1067 = vmatpush2.bf16.msra.mxu0 %v904
    %1068 = vmatprep.subr.bf16.mxu0 %v903
    %1069 = vmatpush2.bf16.msra.mxu0 %v902
    %1070 = vmatprep.subr.bf16.mxu0 %v901
    %1071 = vmatpush2.bf16.msra.mxu0 %v900
    %1072 = vmatprep.subr.bf16.mxu0 %v899
    %1073 = vmatpush2.bf16.msra.mxu0 %v898
    %1074 = vmatprep.mubr.bf16.mxu0 %v566
    %1075 = vmatmul.mubr.bf16.gmra.mxu0 %v565
    %v1076 = vpop.f32.mrf.mxu0
    %v1077 = vadd.f32 %v650, %v1076
    %v1078 = vpop.f32.mrf.mxu0
    %v1079 = vadd.f32 %v654, %v1078
    %v1080 = vpop.f32.mrf.mxu0
    %v1081 = vpop.f32.mrf.mxu0
    %1082 = vdwg.mxu0
    %1083 = vmatprep.subr.bf16.mxu0 %v929
    %1084 = vmatpush1.bf16.msra.mxu0 %v928
    %1085 = vmatprep.subr.bf16.mxu0 %v927
    %1086 = vmatpush1.bf16.msra.mxu0 %v926
    %1087 = vmatprep.subr.bf16.mxu0 %v925
    %1088 = vmatpush1.bf16.msra.mxu0 %v924
    %1089 = vmatprep.subr.bf16.mxu0 %v923
    %1090 = vmatpush1.bf16.msra.mxu0 %v922
    %1091 = vmatprep.subr.bf16.mxu0 %v921
    %1092 = vmatpush1.bf16.msra.mxu0 %v920
    %1093 = vmatprep.subr.bf16.mxu0 %v919
    %1094 = vmatpush1.bf16.msra.mxu0 %v918
    %1095 = vmatprep.subr.bf16.mxu0 %v917
    %1096 = vmatpush1.bf16.msra.mxu0 %v916
    %1097 = vmatprep.subr.bf16.mxu0 %v915
    %1098 = vmatpush1.bf16.msra.mxu0 %v914
    %1099 = vmatprep.subr.bf16.mxu0 %v945
    %1100 = vmatpush2.bf16.msra.mxu0 %v944
    %1101 = vmatprep.subr.bf16.mxu0 %v943
    %1102 = vmatpush2.bf16.msra.mxu0 %v942
    %1103 = vmatprep.subr.bf16.mxu0 %v941
    %1104 = vmatpush2.bf16.msra.mxu0 %v940
    %1105 = vmatprep.subr.bf16.mxu0 %v939
    %1106 = vmatpush2.bf16.msra.mxu0 %v938
    %1107 = vmatprep.subr.bf16.mxu0 %v937
    %1108 = vmatpush2.bf16.msra.mxu0 %v936
    %1109 = vmatprep.subr.bf16.mxu0 %v935
    %1110 = vmatpush2.bf16.msra.mxu0 %v934
    %1111 = vmatprep.subr.bf16.mxu0 %v933
    %1112 = vmatpush2.bf16.msra.mxu0 %v932
    %1113 = vmatprep.subr.bf16.mxu0 %v931
    %1114 = vmatpush2.bf16.msra.mxu0 %v930
    %1115 = vmatprep.mubr.bf16.mxu0 %v568
    %1116 = vmatmul.mubr.bf16.gmra.mxu0 %v567
    %v1117 = vpop.f32.mrf.mxu0
    %v1118 = vadd.f32 %v1077, %v1117
    %v1119 = vpop.f32.mrf.mxu0
    %v1120 = vadd.f32 %v1079, %v1119
    %v1121 = vpop.f32.mrf.mxu0
    %v1122 = vpop.f32.mrf.mxu0
    %1123 = vdwg.mxu0
    %1124 = vmatprep.subr.bf16.mxu0 0
    %1125 = vmatpush1.bf16.msra.mxu0 0
    %1126 = vmatprep.subr.bf16.mxu0 0
    %1127 = vmatpush1.bf16.msra.mxu0 0
    %1128 = vmatprep.subr.bf16.mxu0 %v1040
    %1129 = vmatpush1.bf16.msra.mxu0 %v1037
    %1130 = vmatprep.subr.bf16.mxu0 %v955
    %1131 = vmatpush1.bf16.msra.mxu0 %v954
    %1132 = vmatprep.subr.bf16.mxu0 %v953
    %1133 = vmatpush1.bf16.msra.mxu0 %v952
    %1134 = vmatprep.subr.bf16.mxu0 %v951
    %1135 = vmatpush1.bf16.msra.mxu0 %v950
    %1136 = vmatprep.subr.bf16.mxu0 %v949
    %1137 = vmatpush1.bf16.msra.mxu0 %v948
    %1138 = vmatprep.subr.bf16.mxu0 %v947
    %1139 = vmatpush1.bf16.msra.mxu0 %v946
    %1140 = vmatprep.subr.bf16.mxu0 0
    %1141 = vmatpush2.bf16.msra.mxu0 0
    %1142 = vmatprep.subr.bf16.mxu0 0
    %1143 = vmatpush2.bf16.msra.mxu0 0
    %1144 = vmatprep.subr.bf16.mxu0 0
    %1145 = vmatpush2.bf16.msra.mxu0 0
    %1146 = vmatprep.subr.bf16.mxu0 0
    %1147 = vmatpush2.bf16.msra.mxu0 0
    %1148 = vmatprep.subr.bf16.mxu0 0
    %1149 = vmatpush2.bf16.msra.mxu0 0
    %1150 = vmatprep.subr.bf16.mxu0 0
    %1151 = vmatpush2.bf16.msra.mxu0 0
    %1152 = vmatprep.subr.bf16.mxu0 0
    %1153 = vmatpush2.bf16.msra.mxu0 0
    %1154 = vmatprep.subr.bf16.mxu0 0
    %1155 = vmatpush2.bf16.msra.mxu0 0
    %1156 = vmatprep.mubr.bf16.mxu0 0
    %1157 = vmatmul.mubr.bf16.gmra.mxu0 %v1033
    %v1158 = vpop.f32.mrf.mxu0
    %v1159 = vadd.f32 %v1118, %v1158
    %v1160 = vpop.f32.mrf.mxu0
    %v1161 = vadd.f32 %v1120, %v1160
    %v1162 = vpop.f32.mrf.mxu0
    %v1163 = vpop.f32.mrf.mxu0
    %1164 = vdwg.mxu0
    %vm1165 = vcmask 588800
    %v1166 = vsel %vm1165, %v1161, 0.0
    %v1167 = vadd.f32 %v1159, %v1166
    %1168 = vadd.xlane.f32.xlu0 %v1167
    %v1169 = vpop.xlane.xlu0 %1168
    %v1170 = vrcp.pop 200.0
    %v1171 = vmul.f32 %v1169, %v1170
    %v1172 = vmul.f32 %v1159, %v1159
    %v1173 = vmul.f32 %v1161, %v1161
    %v1174 = vsel %vm1165, %v1173, 0.0
    %v1175 = vadd.f32 %v1172, %v1174
    %1176 = vadd.xlane.f32.xlu0 %v1175
    %v1177 = vpop.xlane.xlu0 %1176
    %v1178 = vmul.f32 %v1177, %v1170
    %v1179 = vmul.f32 %v1171, %v1171
    %v1180 = vsub.f32 %v1178, %v1179
    %v1181 = vadd.f32 %v1180, 1e-05
    %v1182 = vrsqrt.pop %v1181
    %v1183 = vld [vmem:[%s7] sm:$0x3]
    %v1185 = vlaneseq
    %v1186 = vshrl.u32 %v1185, 7
    %v1187 = vsub.s32 0, %v1186
    %v1188 = vrot.slane %v1183, %v1187
    %v1189 = vlaneseq
    %v1190 = vshrl.u32 %v1189, 7
    %v1191 = vsub.s32 1, %v1190
    %v1192 = vrot.slane %v1183, %v1191
    %v1195 = vmul.f32 %v1182, %v1188
    %v1196 = vmul.f32 %v1182, %v1192
    %v1197 = vsub.f32 %v1159, %v1171
    %v1198 = vsub.f32 %v1161, %v1171
    %v1199 = vmul.f32 %v1197, %v1195
    %v1200 = vmul.f32 %v1198, %v1196
    %v1201 = vld [vmem:[%s8] sm:$0x3]
    %v1203 = vlaneseq
    %v1204 = vshrl.u32 %v1203, 7
    %v1205 = vsub.s32 0, %v1204
    %v1206 = vrot.slane %v1201, %v1205
    %v1207 = vlaneseq
    %v1208 = vshrl.u32 %v1207, 7
    %v1209 = vsub.s32 1, %v1208
    %v1210 = vrot.slane %v1201, %v1209
    %v1213 = vadd.f32 %v1199, %v1206
    %v1214 = vadd.f32 %v1200, %v1210
    %v1215 = vmax.f32 %v1213, 0.0
    %v1216 = vmax.f32 %v1214, 0.0
    %v1217 = vpack.c.bf16 %v1215, %v1215
    %v1218 = vpack.c.bf16 %v1216, %v1216
    %v1219 = vld [vmem:[%s9] sm:$0xf]
    %v1220 = vld [vmem:[%s9 + $0x4] sm:$0xf]
    %v1221 = vld [vmem:[%s9 + $0x8] sm:$0xf]
    %v1222 = vld [vmem:[%s9 + $0xc] sm:$0xf]
    %v1223 = vld [vmem:[%s9 + $0x10] sm:$0xf]
    %v1224 = vld [vmem:[%s9 + $0x14] sm:$0xf]
    %v1225 = vld [vmem:[%s9 + $0x18] sm:$0xf]
    %v1226 = vld [vmem:[%s9 + $0x1c] sm:$0xf]
    %v1227 = vld [vmem:[%s9 + $0x20] sm:$0xf]
    %v1228 = vld [vmem:[%s9 + $0x24] sm:$0xf]
    %v1229 = vld [vmem:[%s9 + $0x28] sm:$0xf]
    %v1230 = vld [vmem:[%s9 + $0x2c] sm:$0xf]
    %v1231 = vld [vmem:[%s9 + $0x30] sm:$0xf]
    %v1232 = vld [vmem:[%s9 + $0x34] sm:$0xf]
    %v1233 = vld [vmem:[%s9 + $0x38] sm:$0xf]
    %v1234 = vld [vmem:[%s9 + $0x3c] sm:$0xf]
    %v1235 = vld [vmem:[%s9 + $0x40] sm:$0xf]
    %v1236 = vld [vmem:[%s9 + $0x44] sm:$0xf]
    %v1237 = vld [vmem:[%s9 + $0x48] sm:$0xf]
    %v1238 = vld [vmem:[%s9 + $0x4c] sm:$0xf]
    %v1239 = vld [vmem:[%s9 + $0x50] sm:$0xf]
    %v1240 = vld [vmem:[%s9 + $0x54] sm:$0xf]
    %v1241 = vld [vmem:[%s9 + $0x58] sm:$0xf]
    %v1242 = vld [vmem:[%s9 + $0x5c] sm:$0xf]
    %v1243 = vld [vmem:[%s9 + $0x60] sm:$0xf]
    %v1244 = vld [vmem:[%s10] sm:$0x1]
    %v1246 = vlaneseq
    %v1247 = vshrl.u32 %v1246, 7
    %v1248 = vsub.s32 0, %v1247
    %v1249 = vrot.slane %v1244, %v1248
    %v1276 = vunpack.c.l.b16 %v1219
    %v1277 = vunpack.c.l.b16 %v1220
    %v1278 = vunpack.c.l.b16 %v1221
    %v1279 = vunpack.c.l.b16 %v1222
    %v1280 = vunpack.c.l.b16 %v1223
    %v1281 = vunpack.c.l.b16 %v1224
    %v1282 = vunpack.c.l.b16 %v1225
    %v1283 = vunpack.c.l.b16 %v1226
    %v1284 = vunpack.c.l.b16 %v1227
    %v1285 = vunpack.c.l.b16 %v1228
    %v1286 = vunpack.c.l.b16 %v1229
    %v1287 = vunpack.c.l.b16 %v1230
    %v1288 = vunpack.c.l.b16 %v1231
    %v1289 = vunpack.c.l.b16 %v1232
    %v1290 = vunpack.c.l.b16 %v1233
    %v1291 = vunpack.c.l.b16 %v1234
    %v1292 = vunpack.c.l.b16 %v1235
    %v1293 = vunpack.c.l.b16 %v1236
    %v1294 = vunpack.c.l.b16 %v1237
    %v1295 = vunpack.c.l.b16 %v1238
    %v1296 = vunpack.c.l.b16 %v1239
    %v1297 = vunpack.c.l.b16 %v1240
    %v1298 = vunpack.c.l.b16 %v1241
    %v1299 = vunpack.c.l.b16 %v1242
    %v1300 = vunpack.c.l.b16 %v1243
    %v1301 = vpack.c.b16 %v1277, %v1276
    %v1302 = vpack.c.b16 %v1279, %v1278
    %v1303 = vpack.c.b16 %v1281, %v1280
    %v1304 = vpack.c.b16 %v1283, %v1282
    %v1305 = vpack.c.b16 %v1285, %v1284
    %v1306 = vpack.c.b16 %v1287, %v1286
    %v1307 = vpack.c.b16 %v1289, %v1288
    %v1308 = vpack.c.b16 %v1291, %v1290
    %v1309 = vpack.c.b16 %v1293, %v1292
    %v1310 = vpack.c.b16 %v1295, %v1294
    %v1311 = vpack.c.b16 %v1297, %v1296
    %v1312 = vpack.c.b16 %v1299, %v1298
    %v1313 = vpack.c.b16 %v1300, %v1300
    %v1327 = vsel %vm1165, %v1218, 0
    %v1330 = vsel %vm1035, %v1313, 0
    %1332 = vmatprep.subr.bf16.mxu0 0
    %1333 = vmatpush1.bf16.msra.mxu0 %v1308
    %1334 = vmatprep.subr.bf16.mxu0 0
    %1335 = vmatpush1.bf16.msra.mxu0 %v1307
    %1336 = vmatprep.subr.bf16.mxu0 0
    %1337 = vmatpush1.bf16.msra.mxu0 %v1306
    %1338 = vmatprep.subr.bf16.mxu0 0
    %1339 = vmatpush1.bf16.msra.mxu0 %v1305
    %1340 = vmatprep.subr.bf16.mxu0 0
    %1341 = vmatpush1.bf16.msra.mxu0 %v1304
    %1342 = vmatprep.subr.bf16.mxu0 0
    %1343 = vmatpush1.bf16.msra.mxu0 %v1303
    %1344 = vmatprep.subr.bf16.mxu0 0
    %1345 = vmatpush1.bf16.msra.mxu0 %v1302
    %1346 = vmatprep.subr.bf16.mxu0 0
    %1347 = vmatpush1.bf16.msra.mxu0 %v1301
    %1348 = vmatprep.subr.bf16.mxu0 0
    %1349 = vmatpush2.bf16.msra.mxu0 0
    %1350 = vmatprep.subr.bf16.mxu0 0
    %1351 = vmatpush2.bf16.msra.mxu0 0
    %1352 = vmatprep.subr.bf16.mxu0 0
    %1353 = vmatpush2.bf16.msra.mxu0 0
    %1354 = vmatprep.subr.bf16.mxu0 0
    %1355 = vmatpush2.bf16.msra.mxu0 %v1330
    %1356 = vmatprep.subr.bf16.mxu0 0
    %1357 = vmatpush2.bf16.msra.mxu0 %v1312
    %1358 = vmatprep.subr.bf16.mxu0 0
    %1359 = vmatpush2.bf16.msra.mxu0 %v1311
    %1360 = vmatprep.subr.bf16.mxu0 0
    %1361 = vmatpush2.bf16.msra.mxu0 %v1310
    %1362 = vmatprep.subr.bf16.mxu0 0
    %1363 = vmatpush2.bf16.msra.mxu0 %v1309
    %1364 = vmatprep.mubr.bf16.mxu0 %v1327
    %1365 = vmatmul.mubr.bf16.gmra.mxu0 %v1217
    %v1366 = vpop.f32.mrf.mxu0
    %v1367 = vadd.f32 %v1249, %v1366
    %v1368 = vpop.f32.mrf.mxu0
    %v1369 = vpop.f32.mrf.mxu0
    %v1370 = vpop.f32.mrf.mxu0
    %1371 = vdwg.mxu0
    %vm1372 = vcmask 818176
    %v1373 = vsel %vm1372, %v1367, 0.0
    %1374 = vadd.xlane.f32.xlu0 %v1373
    %v1375 = vpop.xlane.xlu0 %1374
    %v1376 = vrcp.pop 100.0
    %v1377 = vmul.f32 %v1375, %v1376
    %v1378 = vmul.f32 %v1367, %v1367
    %v1379 = vsel %vm1372, %v1378, 0.0
    %1380 = vadd.xlane.f32.xlu0 %v1379
    %v1381 = vpop.xlane.xlu0 %1380
    %v1382 = vmul.f32 %v1381, %v1376
    %v1383 = vmul.f32 %v1377, %v1377
    %v1384 = vsub.f32 %v1382, %v1383
    %v1385 = vadd.f32 %v1384, 1e-05
    %v1386 = vrsqrt.pop %v1385
    %v1387 = vld [vmem:[%s11] sm:$0x1]
    %v1389 = vlaneseq
    %v1390 = vshrl.u32 %v1389, 7
    %v1391 = vsub.s32 0, %v1390
    %v1392 = vrot.slane %v1387, %v1391
    %v1394 = vmul.f32 %v1386, %v1392
    %v1395 = vsub.f32 %v1367, %v1377
    %v1396 = vmul.f32 %v1395, %v1394
    %v1397 = vld [vmem:[%s12] sm:$0x1]
    %v1399 = vlaneseq
    %v1400 = vshrl.u32 %v1399, 7
    %v1401 = vsub.s32 0, %v1400
    %v1402 = vrot.slane %v1397, %v1401
    %v1404 = vadd.f32 %v1396, %v1402
    %v1405 = vmax.f32 %v1404, 0.0
    %v1406 = vpack.c.bf16 %v1405, %v1405
    %v1407 = vld [vmem:[%s13] sm:$0xf]
    %v1408 = vld [vmem:[%s13 + $0x4] sm:$0xf]
    %v1409 = vld [vmem:[%s13 + $0x8] sm:$0xf]
    %v1410 = vld [vmem:[%s13 + $0xc] sm:$0xf]
    %v1411 = vld [vmem:[%s13 + $0x10] sm:$0xf]
    %v1412 = vld [vmem:[%s13 + $0x14] sm:$0xf]
    %v1413 = vld [vmem:[%s13 + $0x18] sm:$0xf]
    %v1414 = vld [vmem:[%s13 + $0x1c] sm:$0xf]
    %v1415 = vld [vmem:[%s13 + $0x20] sm:$0xf]
    %v1416 = vld [vmem:[%s13 + $0x24] sm:$0xf]
    %v1417 = vld [vmem:[%s13 + $0x28] sm:$0xf]
    %v1418 = vld [vmem:[%s13 + $0x2c] sm:$0xf]
    %v1419 = vld [vmem:[%s13 + $0x30] sm:$0x3]
    %v1420 = vld [vmem:[%s14] sm:$0x1]
    %v1422 = vlaneseq
    %v1423 = vshrl.u32 %v1422, 7
    %v1424 = vsub.s32 0, %v1423
    %v1425 = vrot.slane %v1420, %v1424
    %v1440 = vunpack.c.l.b16 %v1407
    %v1441 = vunpack.c.l.b16 %v1408
    %v1442 = vunpack.c.l.b16 %v1409
    %v1443 = vunpack.c.l.b16 %v1410
    %v1444 = vunpack.c.l.b16 %v1411
    %v1445 = vunpack.c.l.b16 %v1412
    %v1446 = vunpack.c.l.b16 %v1413
    %v1447 = vunpack.c.l.b16 %v1414
    %v1448 = vunpack.c.l.b16 %v1415
    %v1449 = vunpack.c.l.b16 %v1416
    %v1450 = vunpack.c.l.b16 %v1417
    %v1451 = vunpack.c.l.b16 %v1418
    %v1452 = vunpack.c.l.b16 %v1419
    %v1453 = vpack.c.b16 %v1441, %v1440
    %v1454 = vpack.c.b16 %v1443, %v1442
    %v1455 = vpack.c.b16 %v1445, %v1444
    %v1456 = vpack.c.b16 %v1447, %v1446
    %v1457 = vpack.c.b16 %v1449, %v1448
    %v1458 = vpack.c.b16 %v1451, %v1450
    %v1459 = vpack.c.b16 %v1452, %v1452
    %v1467 = vsel %vm1372, %v1406, 0
    %vm1469 = vcmask 1041408
    %v1471 = vsel %vm1469, %v1459, 0
    %1473 = vmatprep.subr.bf16.mxu0 0
    %1474 = vmatpush1.bf16.msra.mxu0 0
    %1475 = vmatprep.subr.bf16.mxu0 0
    %1476 = vmatpush1.bf16.msra.mxu0 %v1471
    %1477 = vmatprep.subr.bf16.mxu0 0
    %1478 = vmatpush1.bf16.msra.mxu0 %v1458
    %1479 = vmatprep.subr.bf16.mxu0 0
    %1480 = vmatpush1.bf16.msra.mxu0 %v1457
    %1481 = vmatprep.subr.bf16.mxu0 0
    %1482 = vmatpush1.bf16.msra.mxu0 %v1456
    %1483 = vmatprep.subr.bf16.mxu0 0
    %1484 = vmatpush1.bf16.msra.mxu0 %v1455
    %1485 = vmatprep.subr.bf16.mxu0 0
    %1486 = vmatpush1.bf16.msra.mxu0 %v1454
    %1487 = vmatprep.subr.bf16.mxu0 0
    %1488 = vmatpush1.bf16.msra.mxu0 %v1453
    %1489 = vmatprep.subr.bf16.mxu0 0
    %1490 = vmatpush2.bf16.msra.mxu0 0
    %1491 = vmatprep.subr.bf16.mxu0 0
    %1492 = vmatpush2.bf16.msra.mxu0 0
    %1493 = vmatprep.subr.bf16.mxu0 0
    %1494 = vmatpush2.bf16.msra.mxu0 0
    %1495 = vmatprep.subr.bf16.mxu0 0
    %1496 = vmatpush2.bf16.msra.mxu0 0
    %1497 = vmatprep.subr.bf16.mxu0 0
    %1498 = vmatpush2.bf16.msra.mxu0 0
    %1499 = vmatprep.subr.bf16.mxu0 0
    %1500 = vmatpush2.bf16.msra.mxu0 0
    %1501 = vmatprep.subr.bf16.mxu0 0
    %1502 = vmatpush2.bf16.msra.mxu0 0
    %1503 = vmatprep.subr.bf16.mxu0 0
    %1504 = vmatpush2.bf16.msra.mxu0 0
    %1505 = vmatprep.mubr.bf16.mxu0 0
    %1506 = vmatmul.mubr.bf16.gmra.mxu0 %v1467
    %v1507 = vpop.f32.mrf.mxu0
    %v1508 = vadd.f32 %v1425, %v1507
    %v1509 = vpop.f32.mrf.mxu0
    %v1510 = vpop.f32.mrf.mxu0
    %v1511 = vpop.f32.mrf.mxu0
    %1512 = vdwg.mxu0
    %v1513 = vxor.u32 %v1508, 2147483648
    %v1514 = vmul.f32 %v1513, 1.442695
    %v1515 = vpow.pop %v1514
    %v1516 = vadd.f32 %v1515, 1.0
    %v1517 = vrcp.pop %v1516
    %v1518 = vmul.f32 1.0, %v1517
    %1519 = vst [vmem:[#allocation2] sm:$0xff] %v1518
    // Predicated region
    $region62: #{generator_forward.1} parent=1 // pred_check
      _
    $region63: #{generator_forward.1} parent=1 // pred_check_branch
      %1521 = sbr.rel (0) target = $region65
    $region64: #{generator_forward.1} parent=1 // pred_region
      %s1523 = ssub.s32 128, 128
      %1524 = vsyncadd [#allocation3], %s1523
      %s1526 = sshll.u32 [#allocation2], 4
      %s1527 = int_to_ptr.vmem [resolvable:$true] %s1526
      %1529 = dma.vmem_to_hbm [thread:$0]  %s1527, 128, %s15, [#allocation3]
    $region65: #{generator_forward.1} parent=1 // pred_fallthru
      _
    // Predicated region
    $region66: #{generator_forward.1} parent=1 // pred_check
      _
    $region67: #{generator_forward.1} parent=1 // pred_check_branch
      %1531 = sbr.rel (0) target = $region69
    $region68: #{generator_forward.1} parent=1 // pred_region
      %1532 = dma.done [#allocation3], 128
    $region69: #{generator_forward.1} parent=1 // pred_fallthru
      _
    %1533 = vsyncpa [#allocation3], 1

</llo_original>
